<compile_context>
chip_gen: v7x
topology: tpu7x:2x2x1
jax: 0.10.0
libtpu: 0.0.40
codegen_flags: <defaults>
</compile_context>

<pallas_src>
from functools import partial

import jax
import jax.numpy as jnp
from jax.experimental import pallas as pl
from jax.experimental.pallas import tpu as pltpu

NUM_WS = 14              # StyleGAN2 celebahq-256 has 14 w layers
LATENT_DIM = 512
LATENT_FLAT = NUM_WS * LATENT_DIM   # 7168, multiple of 128 (lane-dense)
FEAT_DIM = 2048          # resnext50 penultimate feature dim
NUM_ATTR = 40            # fc = nn.Linear(2048, 40)
ATTR_PAD = 128           # lane-dense padded output width for the fc head

_IMG_LANE = 1024         # lane width of the flattened image slab
_IMG_ROW_BLOCK = 1024    # 1024 * 1024 * 4B = 4 MiB per block
_LAT_ROW_BLOCK = 64      # 64 * 7168 * 4B = 1.75 MiB per block


# ---------------------------------------------------------------------------
# Kernel 1: latent modulation  lrelu(latent * std + mean, slope=0.2)
#           lane-dense (lb, 7168) slab, tiled rows, parallel grid
# ---------------------------------------------------------------------------
def _latent_mod_kernel(latent_ref, std_ref, mean_ref, out_ref):
    x = latent_ref[...] * std_ref[...] + mean_ref[...]   # (bm,7168)*(1,7168)
    out_ref[...] = jnp.where(x >= 0, x, 0.2 * x)          # LeakyReLU(0.2)


def latent_modulate(latent, std, mean, *, in_place=False):
    lb = latent.shape[0]
    flat = latent.reshape(lb, LATENT_FLAT)               # free reshape
    std2 = std.reshape(1, LATENT_FLAT)
    mean2 = mean.reshape(1, LATENT_FLAT)

    # full-array block if small (no 8-divisibility requirement), else 64-row
    # tiles (multiple of 8) with the last block masked.
    block_m = lb if lb <= _LAT_ROW_BLOCK else _LAT_ROW_BLOCK
    grid = (pl.cdiv(lb, block_m),)

    out = pl.pallas_call(
        _latent_mod_kernel,
        out_shape=jax.ShapeDtypeStruct((lb, LATENT_FLAT), latent.dtype),
        grid=grid,
        in_specs=[
            pl.BlockSpec((block_m, LATENT_FLAT), lambda i: (i, 0)),
            pl.BlockSpec((1, LATENT_FLAT), lambda i: (0, 0)),
            pl.BlockSpec((1, LATENT_FLAT), lambda i: (0, 0)),
        ],
        out_specs=pl.BlockSpec((block_m, LATENT_FLAT), lambda i: (i, 0)),
        compiler_params=pltpu.CompilerParams(
            dimension_semantics=("parallel",)),
        input_output_aliases=({0: 0} if in_place else {}),
    )(flat, std2, mean2)
    return out.reshape(lb, NUM_WS, LATENT_DIM)


# ---------------------------------------------------------------------------
# Kernel 2: image post-process  clamp((x + 1) / 2, 0, 1)
#           lane-dense (rows, 1024) slab, 4 MiB row tiles, parallel grid
# ---------------------------------------------------------------------------
def _img_rescale_kernel(x_ref, o_ref):
    y = (x_ref[...] + 1.0) * 0.5
    o_ref[...] = jnp.clip(y, 0.0, 1.0)


def image_rescale_clamp(x, *, in_place=False):
    orig_shape = x.shape
    n = x.size

    padded = (n % _IMG_LANE) != 0
    if not padded:
        flat = x.reshape(-1, _IMG_LANE)                    # free reshape
    else:
        # Fallback only: real PULSE images (3*256*256 per sample) divide 1024
        # evenly, so this full-copy pad path never triggers there.
        pad = _IMG_LANE - (n % _IMG_LANE)
        flat = jnp.pad(x.reshape(-1), (0, pad)).reshape(-1, _IMG_LANE)

    rows = flat.shape[0]
    # full-array block if small (no 8-divisibility requirement), else 4 MiB
    # tiles (multiple of 8 rows); ragged tail handled by the masked last block.
    row_block = rows if rows <= _IMG_ROW_BLOCK else _IMG_ROW_BLOCK
    grid = (pl.cdiv(rows, row_block),)

    out2 = pl.pallas_call(
        _img_rescale_kernel,
        out_shape=jax.ShapeDtypeStruct((rows, _IMG_LANE), x.dtype),
        grid=grid,
        in_specs=[pl.BlockSpec((row_block, _IMG_LANE), lambda i: (i, 0))],
        out_specs=pl.BlockSpec((row_block, _IMG_LANE), lambda i: (i, 0)),
        compiler_params=pltpu.CompilerParams(
            dimension_semantics=("parallel",),
            vmem_limit_bytes=32 * 1024 * 1024),   # covers v5e's 16 MiB default
        input_output_aliases=({0: 0} if in_place else {}),
    )(flat)

    if padded:
        return out2.reshape(-1)[:n].reshape(orig_shape)
    return out2.reshape(orig_shape)


# ---------------------------------------------------------------------------
# Kernel 3: attribute classifier head  Linear(2048, 40):  x @ W + b
#           N pre-padded to 128 once at init (lane-dense stores, full MXU
#           columns); M padded to a multiple of 8; one call per forward.
# ---------------------------------------------------------------------------
def _fc_kernel(x_ref, w_ref, b_ref, o_ref):
    o_ref[...] = (
        jnp.dot(x_ref[...], w_ref[...], preferred_element_type=jnp.float32)
        + b_ref[...]
    )


def pad_fc_params(w, b):
    """Pad fc weights/bias to lane-dense width ONCE at init (not per call)."""
    w_p = jnp.pad(w, ((0, 0), (0, ATTR_PAD - w.shape[1])))
    b2 = b.reshape(1, -1)
    b_p = jnp.pad(b2, ((0, 0), (0, ATTR_PAD - b2.shape[1])))
    return w_p, b_p


def attr_head(features, w_pad, b_pad):
    m = features.shape[0]
    m_pad = max(8, (-(-m // 8)) * 8)
    x = features if m_pad == m else jnp.pad(features, ((0, m_pad - m), (0, 0)))

    out = pl.pallas_call(
        _fc_kernel,
        out_shape=jax.ShapeDtypeStruct((m_pad, ATTR_PAD), jnp.float32),
        grid=(1,),
        in_specs=[
            pl.BlockSpec((m_pad, FEAT_DIM), lambda i: (0, 0)),
            pl.BlockSpec((FEAT_DIM, ATTR_PAD), lambda i: (0, 0)),
            pl.BlockSpec((1, ATTR_PAD), lambda i: (0, 0)),
        ],
        out_specs=pl.BlockSpec((m_pad, ATTR_PAD), lambda i: (0, 0)),
    )(x, w_pad, b_pad)
    return out[:m, :NUM_ATTR]


# ---------------------------------------------------------------------------
# Batched, jitted core: one Pallas call per kernel for the whole forward,
# plus one vectorized score gather (no per-latent scalar device reads).
# ---------------------------------------------------------------------------
@partial(jax.jit, static_argnames=("latent_num",))
def _pulse_core(ref_im, gaussian_std, gaussian_mean, fc_w_pad, fc_b_pad, key,
                latent_num):
    batch_size = ref_im.shape[0]
    lb = latent_num * batch_size
    k_lat, k_syn, k_feat = jax.random.split(key, 3)

    # latent ~ N(0, 1) for all latent_num iterations at once  (tile_latent=False)
    latent = jax.random.normal(k_lat, (lb, NUM_WS, LATENT_DIM), jnp.float32)
    # hot path: lrelu(latent * std + mean)  -- Pallas kernel 1 (one call,
    # in-place: `latent` is not used again)
    latent_in = latent_modulate(latent, gaussian_std, gaussian_mean,
                                in_place=True)

    # TODO(synk): G.synthesis (StyleGAN2 synthesis net) is an external
    # pretrained model; stand-in raw output in [-1, 1].
    raw_im = jnp.tanh(jax.random.normal(
        k_syn, (latent_num,) + ref_im.shape, jnp.float32))
    # gen_im = clamp((synthesis + 1) / 2, 0, 1)  -- Pallas kernel 2 (one call,
    # in-place: `raw_im` is not used again)
    gen_im = image_rescale_clamp(raw_im, in_place=True)

    # TODO(synk): resnext50_32x4d convolutional backbone is external
    # (pretrained checkpoint); only its fc head Linear(2048, 40) is
    # implemented, fed by stand-in pooled features.
    features = jax.random.normal(k_feat, (lb, FEAT_DIM), jnp.float32)
    scores = attr_head(features, fc_w_pad, fc_b_pad)   # Pallas kernel 3

    # one vectorized gather of the 5 attribute scores of batch element 0 of
    # each latent iteration: rows 0, batch, 2*batch, ...; cols 31,5,9,8,11
    attr_idx = jnp.array([31, 5, 9, 8, 11], dtype=jnp.int32)
    sel_scores = scores[::batch_size][:, attr_idx]        # (latent_num, 5)

    latent_in = latent_in.reshape(latent_num, batch_size, NUM_WS, LATENT_DIM)
    return latent_in, gen_im, sel_scores


# ---------------------------------------------------------------------------
# Forward wrapper (mirrors the structure of PULSE.forward, minus the
# optimizer loop and external pretrained networks).
# ---------------------------------------------------------------------------
def pulse_forward(ref_im, gaussian_std, gaussian_mean, fc_w_pad, fc_b_pad,
                  latent_num, key):
    latent_in, gen_im, sel = _pulse_core(
        ref_im, gaussian_std, gaussian_mean, fc_w_pad, fc_b_pad, key,
        latent_num=latent_num)

    images = [gen_im[i] for i in range(latent_num)]
    latents = [latent_in[i] for i in range(latent_num)]
    scores_smile = [sel[i, 0] for i in range(latent_num)]
    scores_bang = [sel[i, 1] for i in range(latent_num)]
    scores_blonde = [sel[i, 2] for i in range(latent_num)]
    scores_black = [sel[i, 3] for i in range(latent_num)]
    scores_brown = [sel[i, 4] for i in range(latent_num)]

    # TODO(synk): SphericalOptimizer / LossBuilder / LR-scheduler optimization
    # loop has no Pallas equivalent (autograd + external losses); omitted.
    return (images, latents, scores_smile, scores_bang,
            scores_blonde, scores_brown, scores_black)


if __name__ == "__main__":
    key = jax.random.PRNGKey(0)
    k_ref, k_map, k_w, k_b, k_fwd, k_chk = jax.random.split(key, 6)

    batch_size = 2
    ref_im = jax.random.uniform(k_ref, (batch_size, 3, 16, 16), jnp.float32)

    # gaussian_fit: mean/std over LeakyReLU(5)(mapping-network output).
    # TODO(synk): G.mapping is an external pretrained net; synthetic stand-in.
    mapped = jax.random.normal(k_map, (256, NUM_WS, LATENT_DIM), jnp.float32)
    mapped = jnp.where(mapped >= 0, mapped, 5.0 * mapped)     # LeakyReLU(5)
    gaussian_mean = jnp.mean(mapped, axis=0)                  # (14, 512)
    gaussian_std = jnp.std(mapped, axis=0, ddof=1)            # (14, 512)

    # fc = nn.Linear(2048, 40) parameters (stored transposed: (in, out)),
    # padded to lane-dense width ONCE here, not per forward call.
    fc_w = jax.random.normal(k_w, (FEAT_DIM, NUM_ATTR), jnp.float32) * 0.02
    fc_b = jax.random.normal(k_b, (1, NUM_ATTR), jnp.float32) * 0.01
    fc_w_pad, fc_b_pad = pad_fc_params(fc_w, fc_b)

    out = pulse_forward(ref_im, gaussian_std, gaussian_mean,
                        fc_w_pad, fc_b_pad, latent_num=2, key=k_fwd)
    out = jax.block_until_ready(out)

    # correctness checks of the three Pallas kernels vs plain JAX
    k1, k2, k3 = jax.random.split(k_chk, 3)

    lat = jax.random.normal(k1, (4, NUM_WS, LATENT_DIM), jnp.float32)
    want = jax.nn.leaky_relu(lat * gaussian_std + gaussian_mean,
                             negative_slope=0.2)
    got = latent_modulate(lat, gaussian_std, gaussian_mean)
    assert jnp.allclose(got, want, atol=1e-5), "latent_modulate mismatch"

    raw = jnp.tanh(jax.random.normal(k2, (2,) + ref_im.shape, jnp.float32))
    want = jnp.clip((raw + 1.0) * 0.5, 0.0, 1.0)
    got = image_rescale_clamp(raw)
    assert jnp.allclose(got, want, atol=1e-6), "image_rescale_clamp mismatch"

    feats = jax.random.normal(k3, (4, FEAT_DIM), jnp.float32)
    want = feats @ fc_w + fc_b
    got = attr_head(feats, fc_w_pad, fc_b_pad)
    assert jnp.allclose(got, want, atol=1e-4), "attr_head mismatch"

    print("KERNEL_OK")
</pallas_src>

<mosaic_0001>
module attributes {stable_mosaic.version = 11 : i64} {
  func.func @_latent_mod_kernel(%arg0: i32, %arg1: memref<4x7168xf32, #tpu.memory_space<vmem>>, %arg2: memref<1x7168xf32, #tpu.memory_space<vmem>>, %arg3: memref<1x7168xf32, #tpu.memory_space<vmem>>, %arg4: memref<4x7168xf32, #tpu.memory_space<vmem>>) attributes {dimension_semantics = [#tpu.dimension_semantics<parallel>], iteration_bounds = array<i64: 1>, scalar_prefetch = 0 : i64, scratch_operands = 0 : i64, tpu.core_type = #tpu.core_type<tc>, window_params = [{transform_indices = @transform_0, window_bounds = array<i64: 4, 7168>}, {pipeline_mode = #tpu.pipeline_mode<synchronous>, transform_indices = @transform_1, window_bounds = array<i64: 1, 7168>}, {pipeline_mode = #tpu.pipeline_mode<synchronous>, transform_indices = @transform_2, window_bounds = array<i64: 1, 7168>}, {transform_indices = @transform_3, window_bounds = array<i64: 4, 7168>}]} {
    %c0 = arith.constant 0 : index
    %c0_0 = arith.constant 0 : index
    %0 = vector.load %arg1[%c0, %c0_0] : memref<4x7168xf32, #tpu.memory_space<vmem>>, vector<4x7168xf32>
    %c0_1 = arith.constant 0 : index
    %c0_2 = arith.constant 0 : index
    %1 = vector.load %arg2[%c0_1, %c0_2] : memref<1x7168xf32, #tpu.memory_space<vmem>>, vector<1x7168xf32>
    %2 = vector.broadcast %1 : vector<1x7168xf32> to vector<4x7168xf32>
    %3 = arith.mulf %0, %2 : vector<4x7168xf32>
    %c0_3 = arith.constant 0 : index
    %c0_4 = arith.constant 0 : index
    %4 = vector.load %arg3[%c0_3, %c0_4] : memref<1x7168xf32, #tpu.memory_space<vmem>>, vector<1x7168xf32>
    %5 = vector.broadcast %4 : vector<1x7168xf32> to vector<4x7168xf32>
    %6 = arith.addf %3, %5 : vector<4x7168xf32>
    %cst = arith.constant 0.000000e+00 : f32
    %7 = vector.broadcast %cst : f32 to vector<4x7168xf32>
    %8 = arith.cmpf oge, %6, %7 : vector<4x7168xf32>
    %cst_5 = arith.constant 2.000000e-01 : f32
    %9 = vector.broadcast %cst_5 : f32 to vector<4x7168xf32>
    %10 = arith.mulf %9, %6 : vector<4x7168xf32>
    %11 = arith.select %8, %6, %10 : vector<4x7168xi1>, vector<4x7168xf32>
    %c0_6 = arith.constant 0 : index
    %c0_7 = arith.constant 0 : index
    %12 = vector.load %arg4[%c0_6, %c0_7] : memref<4x7168xf32, #tpu.memory_space<vmem>>, vector<4x7168xf32>
    tpu.vector_store %arg4[%c0_6, %c0_7], %11 {strides = array<i32>} : memref<4x7168xf32, #tpu.memory_space<vmem>>, vector<4x7168xf32>,
    return
  }
  func.func @transform_0(%arg0: i32) -> (i32, i32) {
    %c0_i32 = arith.constant 0 : i32
    %c0_i32_0 = arith.constant 0 : i32
    return %arg0, %c0_i32 : i32, i32
  }
  func.func @transform_1(%arg0: i32) -> (i32, i32) {
    %c0_i32 = arith.constant 0 : i32
    %c0_i32_0 = arith.constant 0 : i32
    %c0_i32_1 = arith.constant 0 : i32
    return %c0_i32, %c0_i32_0 : i32, i32
  }
  func.func @transform_2(%arg0: i32) -> (i32, i32) {
    %c0_i32 = arith.constant 0 : i32
    %c0_i32_0 = arith.constant 0 : i32
    %c0_i32_1 = arith.constant 0 : i32
    return %c0_i32, %c0_i32_0 : i32, i32
  }
  func.func @transform_3(%arg0: i32) -> (i32, i32) {
    %c0_i32 = arith.constant 0 : i32
    %c0_i32_0 = arith.constant 0 : i32
    return %arg0, %c0_i32 : i32, i32
  }
}

module attributes {stable_mosaic.version = 11 : i64} {
  func.func @_img_rescale_kernel(%arg0: i32, %arg1: memref<3x1024xf32, #tpu.memory_space<vmem>>, %arg2: memref<3x1024xf32, #tpu.memory_space<vmem>>) attributes {dimension_semantics = [#tpu.dimension_semantics<parallel>], iteration_bounds = array<i64: 1>, scalar_prefetch = 0 : i64, scratch_operands = 0 : i64, tpu.core_type = #tpu.core_type<tc>, window_params = [{transform_indices = @transform_0, window_bounds = array<i64: 3, 1024>}, {transform_indices = @transform_1, window_bounds = array<i64: 3, 1024>}]} {
    %c0 = arith.constant 0 : index
    %c0_0 = arith.constant 0 : index
    %0 = vector.load %arg1[%c0, %c0_0] : memref<3x1024xf32, #tpu.memory_space<vmem>>, vector<3x1024xf32>
    %cst = arith.constant 1.000000e+00 : f32
    %1 = vector.broadcast %cst : f32 to vector<3x1024xf32>
    %2 = arith.addf %0, %1 : vector<3x1024xf32>
    %cst_1 = arith.constant 5.000000e-01 : f32
    %3 = vector.broadcast %cst_1 : f32 to vector<3x1024xf32>
    %4 = arith.mulf %2, %3 : vector<3x1024xf32>
    %cst_2 = arith.constant 0.000000e+00 : f32
    %cst_3 = arith.constant 1.000000e+00 : f32
    %5 = vector.broadcast %cst_2 : f32 to vector<3x1024xf32>
    %6 = arith.maximumf %5, %4 : vector<3x1024xf32>
    %7 = vector.broadcast %cst_3 : f32 to vector<3x1024xf32>
    %8 = arith.minimumf %7, %6 : vector<3x1024xf32>
    %c0_4 = arith.constant 0 : index
    %c0_5 = arith.constant 0 : index
    %9 = vector.load %arg2[%c0_4, %c0_5] : memref<3x1024xf32, #tpu.memory_space<vmem>>, vector<3x1024xf32>
    tpu.vector_store %arg2[%c0_4, %c0_5], %8 {strides = array<i32>} : memref<3x1024xf32, #tpu.memory_space<vmem>>, vector<3x1024xf32>,
    return
  }
  func.func @transform_0(%arg0: i32) -> (i32, i32) {
    %c0_i32 = arith.constant 0 : i32
    %c0_i32_0 = arith.constant 0 : i32
    return %arg0, %c0_i32 : i32, i32
  }
  func.func @transform_1(%arg0: i32) -> (i32, i32) {
    %c0_i32 = arith.constant 0 : i32
    %c0_i32_0 = arith.constant 0 : i32
    return %arg0, %c0_i32 : i32, i32
  }
}

module attributes {stable_mosaic.version = 11 : i64} {
  func.func @_fc_kernel(%arg0: i32, %arg1: memref<8x2048xf32, #tpu.memory_space<vmem>>, %arg2: memref<2048x128xf32, #tpu.memory_space<vmem>>, %arg3: memref<1x128xf32, #tpu.memory_space<vmem>>, %arg4: memref<8x128xf32, #tpu.memory_space<vmem>>) attributes {dimension_semantics = [#tpu.dimension_semantics<arbitrary>], iteration_bounds = array<i64: 1>, scalar_prefetch = 0 : i64, scratch_operands = 0 : i64, tpu.core_type = #tpu.core_type<tc>, window_params = [{pipeline_mode = #tpu.pipeline_mode<synchronous>, transform_indices = @transform_0, window_bounds = array<i64: 8, 2048>}, {pipeline_mode = #tpu.pipeline_mode<synchronous>, transform_indices = @transform_1, window_bounds = array<i64: 2048, 128>}, {pipeline_mode = #tpu.pipeline_mode<synchronous>, transform_indices = @transform_2, window_bounds = array<i64: 1, 128>}, {pipeline_mode = #tpu.pipeline_mode<synchronous>, transform_indices = @transform_3, window_bounds = array<i64: 8, 128>}]} {
    %c0 = arith.constant 0 : index
    %c0_0 = arith.constant 0 : index
    %0 = vector.load %arg1[%c0, %c0_0] : memref<8x2048xf32, #tpu.memory_space<vmem>>, vector<8x2048xf32>
    %c0_1 = arith.constant 0 : index
    %c0_2 = arith.constant 0 : index
    %1 = vector.load %arg2[%c0_1, %c0_2] : memref<2048x128xf32, #tpu.memory_space<vmem>>, vector<2048x128xf32>
    %cst = arith.constant dense<0.000000e+00> : vector<8x128xf32>
    %2 = tpu.matmul %0, %1, %cst {dimension_numbers = #tpu.dot_dimension_numbers<[1], [0], [0], [1], [0, 0, 1, 1], [], []>} : vector<8x2048xf32>, vector<2048x128xf32>, vector<8x128xf32> -> vector<8x128xf32>
    %c0_3 = arith.constant 0 : index
    %c0_4 = arith.constant 0 : index
    %3 = vector.load %arg3[%c0_3, %c0_4] : memref<1x128xf32, #tpu.memory_space<vmem>>, vector<1x128xf32>
    %4 = vector.broadcast %3 : vector<1x128xf32> to vector<8x128xf32>
    %5 = arith.addf %2, %4 : vector<8x128xf32>
    %c0_5 = arith.constant 0 : index
    %c0_6 = arith.constant 0 : index
    %6 = vector.load %arg4[%c0_5, %c0_6] : memref<8x128xf32, #tpu.memory_space<vmem>>, vector<8x128xf32>
    tpu.vector_store %arg4[%c0_5, %c0_6], %5 {strides = array<i32>} : memref<8x128xf32, #tpu.memory_space<vmem>>, vector<8x128xf32>,
    return
  }
  func.func @transform_0(%arg0: i32) -> (i32, i32) {
    %c0_i32 = arith.constant 0 : i32
    %c0_i32_0 = arith.constant 0 : i32
    %c0_i32_1 = arith.constant 0 : i32
    return %c0_i32, %c0_i32_0 : i32, i32
  }
  func.func @transform_1(%arg0: i32) -> (i32, i32) {
    %c0_i32 = arith.constant 0 : i32
    %c0_i32_0 = arith.constant 0 : i32
    %c0_i32_1 = arith.constant 0 : i32
    return %c0_i32, %c0_i32_0 : i32, i32
  }
  func.func @transform_2(%arg0: i32) -> (i32, i32) {
    %c0_i32 = arith.constant 0 : i32
    %c0_i32_0 = arith.constant 0 : i32
    %c0_i32_1 = arith.constant 0 : i32
    return %c0_i32, %c0_i32_0 : i32, i32
  }
  func.func @transform_3(%arg0: i32) -> (i32, i32) {
    %c0_i32 = arith.constant 0 : i32
    %c0_i32_0 = arith.constant 0 : i32
    %c0_i32_1 = arith.constant 0 : i32
    return %c0_i32, %c0_i32_0 : i32, i32
  }
}

</mosaic_0001>

<llo_original>
// kernel: _pulse_core.6
$region0: #{_pulse_core.6}
  #allocation0 [shape = 'u32[]', space=smem, size = 0x4, offset = 0x4, fixed_abs, tag = 'smem constant byte address 0x4 - core index']
  #allocation1 [shape = 'u32[144,128]{1,0:T(1,128)}', space=vmem, size = 0x12000, scoped, tag = 'internal scratch']
  %s0 = inlined_call_operand.vmem [shape: f32[3,1024], index: 0, kind: input, shape index: {}, may-alias: {0,1}]
  %s1 = inlined_call_operand.vmem [shape: f32[3,1024], index: 1, kind: output, shape index: {}, may-alias: {0,1}]
  %s2 = sld [smem:[#allocation0]]
  $region14: #{_pulse_core.6} parent=0
    _
  %s4 = ssub.s32 1, %s2
  %s5 = scalar_select 0, %s4, %s2
  // Predicated region
  $region2: #{_pulse_core.6} parent=0 // pred_check
    _
  $region3: #{_pulse_core.6} parent=0 // pred_check_branch
    %7 = sbr.rel (0) target = $region5
  $region4: #{_pulse_core.6} parent=0 // pred_region
    _
  $region5: #{_pulse_core.6} parent=0 // pred_fallthru
    _
  %v8 = vld [vmem:[%s0] sm:$0x77]
  %v9 = vld [vmem:[%s0 + $0x8] sm:$0x77]
  %v10 = vld [vmem:[%s0 + $0x10] sm:$0x77]
  %v11 = vld [vmem:[%s0 + $0x18] sm:$0x77]
  %v12 = vadd.f32 %v8, 1.0
  %v13 = vadd.f32 %v9, 1.0
  %v14 = vadd.f32 %v10, 1.0
  %v15 = vadd.f32 %v11, 1.0
  %v16 = vmul.f32 %v12, 0.5
  %v17 = vmul.f32 %v13, 0.5
  %v18 = vmul.f32 %v14, 0.5
  %v19 = vmul.f32 %v15, 0.5
  %v20 = vmax.f32 %v16, 0.0
  %v21 = vmax.f32 %v17, 0.0
  %v22 = vmax.f32 %v18, 0.0
  %v23 = vmax.f32 %v19, 0.0
  %v24 = vmin.f32 %v20, 1.0
  %v25 = vmin.f32 %v21, 1.0
  %v26 = vmin.f32 %v22, 1.0
  %v27 = vmin.f32 %v23, 1.0
  %28 = vst [vmem:[%s1] sm:$0x77] %v24
  %29 = vst [vmem:[%s1 + $0x8] sm:$0x77] %v25
  %30 = vst [vmem:[%s1 + $0x10] sm:$0x77] %v26
  %31 = vst [vmem:[%s1 + $0x18] sm:$0x77] %v27
  // Predicated region
  $region6: #{_pulse_core.6} parent=0 // pred_check
    _
  $region7: #{_pulse_core.6} parent=0 // pred_check_branch
    %33 = sbr.rel (0) target = $region9
  $region8: #{_pulse_core.6} parent=0 // pred_region
    _
  $region9: #{_pulse_core.6} parent=0 // pred_fallthru
    _
  // Predicated region
  $region10: #{_pulse_core.6} parent=0 // pred_check
    _
  $region11: #{_pulse_core.6} parent=0 // pred_check_branch
    %35 = sbr.rel (0) target = $region13
  $region12: #{_pulse_core.6} parent=0 // pred_region
    _
  $region13: #{_pulse_core.6} parent=0 // pred_fallthru
    _

// kernel: _pulse_core.5
$region0: #{_pulse_core.5}
  #allocation0 [shape = 'u32[]', space=smem, size = 0x4, offset = 0x4, fixed_abs, tag = 'smem constant byte address 0x4 - core index']
  #allocation1 [shape = 'u32[144,128]{1,0:T(1,128)}', space=vmem, size = 0x12000, scoped, tag = 'internal scratch']
  %s0 = inlined_call_operand.vmem [shape: f32[4,7168], index: 0, kind: input, shape index: {}, may-alias: {0,3}]
  %s1 = inlined_call_operand.vmem [shape: f32[1,7168], index: 1, kind: input, shape index: {}]
  %s2 = inlined_call_operand.vmem [shape: f32[1,7168], index: 2, kind: input, shape index: {}]
  %s3 = inlined_call_operand.vmem [shape: f32[4,7168], index: 3, kind: output, shape index: {}, may-alias: {0,3}]
  %s4 = sld [smem:[#allocation0]]
  $region22: #{_pulse_core.5} parent=0
    _
  %s6 = ssub.s32 1, %s4
  %s7 = scalar_select 0, %s6, %s4
  // Predicated region
  $region2: #{_pulse_core.5} parent=0 // pred_check
    _
  $region3: #{_pulse_core.5} parent=0 // pred_check_branch
    %9 = sbr.rel (0) target = $region5
  $region4: #{_pulse_core.5} parent=0 // pred_region
    _
  $region5: #{_pulse_core.5} parent=0 // pred_fallthru
    _
  // Predicated region
  $region6: #{_pulse_core.5} parent=0 // pred_check
    _
  $region7: #{_pulse_core.5} parent=0 // pred_check_branch
    %11 = sbr.rel (0) target = $region9
  $region8: #{_pulse_core.5} parent=0 // pred_region
    _
  $region9: #{_pulse_core.5} parent=0 // pred_fallthru
    _
  // Predicated region
  $region10: #{_pulse_core.5} parent=0 // pred_check
    _
  $region11: #{_pulse_core.5} parent=0 // pred_check_branch
    %13 = sbr.rel (0) target = $region13
  $region12: #{_pulse_core.5} parent=0 // pred_region
    _
  $region13: #{_pulse_core.5} parent=0 // pred_fallthru
    _
  %v14 = vld [vmem:[%s0] sm:$0xff]
  %v15 = vld [vmem:[%s0 + $0x8] sm:$0xff]
  %v16 = vld [vmem:[%s0 + $0x10] sm:$0xff]
  %v17 = vld [vmem:[%s0 + $0x18] sm:$0xff]
  %v18 = vld [vmem:[%s0 + $0x20] sm:$0xff]
  %v19 = vld [vmem:[%s0 + $0x28] sm:$0xff]
  %v20 = vld [vmem:[%s0 + $0x30] sm:$0xff]
  %v21 = vld [vmem:[%s0 + $0x38] sm:$0xff]
  %v22 = vld [vmem:[%s0 + $0x40] sm:$0xff]
  %v23 = vld [vmem:[%s0 + $0x48] sm:$0xff]
  %v24 = vld [vmem:[%s0 + $0x50] sm:$0xff]
  %v25 = vld [vmem:[%s0 + $0x58] sm:$0xff]
  %v26 = vld [vmem:[%s0 + $0x60] sm:$0xff]
  %v27 = vld [vmem:[%s0 + $0x68] sm:$0xff]
  %v28 = vld [vmem:[%s0 + $0x70] sm:$0xff]
  %v29 = vld [vmem:[%s0 + $0x78] sm:$0xff]
  %v30 = vld [vmem:[%s0 + $0x80] sm:$0xff]
  %v31 = vld [vmem:[%s0 + $0x88] sm:$0xff]
  %v32 = vld [vmem:[%s0 + $0x90] sm:$0xff]
  %v33 = vld [vmem:[%s0 + $0x98] sm:$0xff]
  %v34 = vld [vmem:[%s0 + $0xa0] sm:$0xff]
  %v35 = vld [vmem:[%s0 + $0xa8] sm:$0xff]
  %v36 = vld [vmem:[%s0 + $0xb0] sm:$0xff]
  %v37 = vld [vmem:[%s0 + $0xb8] sm:$0xff]
  %v38 = vld [vmem:[%s0 + $0xc0] sm:$0xff]
  %v39 = vld [vmem:[%s0 + $0xc8] sm:$0xff]
  %v40 = vld [vmem:[%s0 + $0xd0] sm:$0xff]
  %v41 = vld [vmem:[%s0 + $0xd8] sm:$0xff]
  %v42 = vld [vmem:[%s1] sm:$0xff]
  %v43 = vld [vmem:[%s1 + $0x8] sm:$0xff]
  %v44 = vld [vmem:[%s1 + $0x10] sm:$0xff]
  %v45 = vld [vmem:[%s1 + $0x18] sm:$0xff]
  %v46 = vld [vmem:[%s1 + $0x20] sm:$0xff]
  %v47 = vld [vmem:[%s1 + $0x28] sm:$0xff]
  %v48 = vld [vmem:[%s1 + $0x30] sm:$0xff]
  %v56 = vlaneseq
  %v57 = vshrl.u32 %v56, 7
  %v58 = vsub.s32 0, %v57
  %v59 = vrot.slane %v42, %v58
  %v60 = vlaneseq
  %v61 = vshrl.u32 %v60, 7
  %v62 = vsub.s32 1, %v61
  %v63 = vrot.slane %v42, %v62
  %v64 = vlaneseq
  %v65 = vshrl.u32 %v64, 7
  %v66 = vsub.s32 2, %v65
  %v67 = vrot.slane %v42, %v66
  %v68 = vlaneseq
  %v69 = vshrl.u32 %v68, 7
  %v70 = vsub.s32 3, %v69
  %v71 = vrot.slane %v42, %v70
  %v72 = vlaneseq
  %v73 = vshrl.u32 %v72, 7
  %v74 = vsub.s32 4, %v73
  %v75 = vrot.slane %v42, %v74
  %v76 = vlaneseq
  %v77 = vshrl.u32 %v76, 7
  %v78 = vsub.s32 5, %v77
  %v79 = vrot.slane %v42, %v78
  %v80 = vlaneseq
  %v81 = vshrl.u32 %v80, 7
  %v82 = vsub.s32 6, %v81
  %v83 = vrot.slane %v42, %v82
  %v84 = vlaneseq
  %v85 = vshrl.u32 %v84, 7
  %v86 = vsub.s32 7, %v85
  %v87 = vrot.slane %v42, %v86
  %v88 = vlaneseq
  %v89 = vshrl.u32 %v88, 7
  %v90 = vsub.s32 0, %v89
  %v91 = vrot.slane %v43, %v90
  %v92 = vlaneseq
  %v93 = vshrl.u32 %v92, 7
  %v94 = vsub.s32 1, %v93
  %v95 = vrot.slane %v43, %v94
  %v96 = vlaneseq
  %v97 = vshrl.u32 %v96, 7
  %v98 = vsub.s32 2, %v97
  %v99 = vrot.slane %v43, %v98
  %v100 = vlaneseq
  %v101 = vshrl.u32 %v100, 7
  %v102 = vsub.s32 3, %v101
  %v103 = vrot.slane %v43, %v102
  %v104 = vlaneseq
  %v105 = vshrl.u32 %v104, 7
  %v106 = vsub.s32 4, %v105
  %v107 = vrot.slane %v43, %v106
  %v108 = vlaneseq
  %v109 = vshrl.u32 %v108, 7
  %v110 = vsub.s32 5, %v109
  %v111 = vrot.slane %v43, %v110
  %v112 = vlaneseq
  %v113 = vshrl.u32 %v112, 7
  %v114 = vsub.s32 6, %v113
  %v115 = vrot.slane %v43, %v114
  %v116 = vlaneseq
  %v117 = vshrl.u32 %v116, 7
  %v118 = vsub.s32 7, %v117
  %v119 = vrot.slane %v43, %v118
  %v120 = vlaneseq
  %v121 = vshrl.u32 %v120, 7
  %v122 = vsub.s32 0, %v121
  %v123 = vrot.slane %v44, %v122
  %v124 = vlaneseq
  %v125 = vshrl.u32 %v124, 7
  %v126 = vsub.s32 1, %v125
  %v127 = vrot.slane %v44, %v126
  %v128 = vlaneseq
  %v129 = vshrl.u32 %v128, 7
  %v130 = vsub.s32 2, %v129
  %v131 = vrot.slane %v44, %v130
  %v132 = vlaneseq
  %v133 = vshrl.u32 %v132, 7
  %v134 = vsub.s32 3, %v133
  %v135 = vrot.slane %v44, %v134
  %v136 = vlaneseq
  %v137 = vshrl.u32 %v136, 7
  %v138 = vsub.s32 4, %v137
  %v139 = vrot.slane %v44, %v138
  %v140 = vlaneseq
  %v141 = vshrl.u32 %v140, 7
  %v142 = vsub.s32 5, %v141
  %v143 = vrot.slane %v44, %v142
  %v144 = vlaneseq
  %v145 = vshrl.u32 %v144, 7
  %v146 = vsub.s32 6, %v145
  %v147 = vrot.slane %v44, %v146
  %v148 = vlaneseq
  %v149 = vshrl.u32 %v148, 7
  %v150 = vsub.s32 7, %v149
  %v151 = vrot.slane %v44, %v150
  %v152 = vlaneseq
  %v153 = vshrl.u32 %v152, 7
  %v154 = vsub.s32 0, %v153
  %v155 = vrot.slane %v45, %v154
  %v156 = vlaneseq
  %v157 = vshrl.u32 %v156, 7
  %v158 = vsub.s32 1, %v157
  %v159 = vrot.slane %v45, %v158
  %v160 = vlaneseq
  %v161 = vshrl.u32 %v160, 7
  %v162 = vsub.s32 2, %v161
  %v163 = vrot.slane %v45, %v162
  %v164 = vlaneseq
  %v165 = vshrl.u32 %v164, 7
  %v166 = vsub.s32 3, %v165
  %v167 = vrot.slane %v45, %v166
  %v168 = vlaneseq
  %v169 = vshrl.u32 %v168, 7
  %v170 = vsub.s32 4, %v169
  %v171 = vrot.slane %v45, %v170
  %v172 = vlaneseq
  %v173 = vshrl.u32 %v172, 7
  %v174 = vsub.s32 5, %v173
  %v175 = vrot.slane %v45, %v174
  %v176 = vlaneseq
  %v177 = vshrl.u32 %v176, 7
  %v178 = vsub.s32 6, %v177
  %v179 = vrot.slane %v45, %v178
  %v180 = vlaneseq
  %v181 = vshrl.u32 %v180, 7
  %v182 = vsub.s32 7, %v181
  %v183 = vrot.slane %v45, %v182
  %v184 = vlaneseq
  %v185 = vshrl.u32 %v184, 7
  %v186 = vsub.s32 0, %v185
  %v187 = vrot.slane %v46, %v186
  %v188 = vlaneseq
  %v189 = vshrl.u32 %v188, 7
  %v190 = vsub.s32 1, %v189
  %v191 = vrot.slane %v46, %v190
  %v192 = vlaneseq
  %v193 = vshrl.u32 %v192, 7
  %v194 = vsub.s32 2, %v193
  %v195 = vrot.slane %v46, %v194
  %v196 = vlaneseq
  %v197 = vshrl.u32 %v196, 7
  %v198 = vsub.s32 3, %v197
  %v199 = vrot.slane %v46, %v198
  %v200 = vlaneseq
  %v201 = vshrl.u32 %v200, 7
  %v202 = vsub.s32 4, %v201
  %v203 = vrot.slane %v46, %v202
  %v204 = vlaneseq
  %v205 = vshrl.u32 %v204, 7
  %v206 = vsub.s32 5, %v205
  %v207 = vrot.slane %v46, %v206
  %v208 = vlaneseq
  %v209 = vshrl.u32 %v208, 7
  %v210 = vsub.s32 6, %v209
  %v211 = vrot.slane %v46, %v210
  %v212 = vlaneseq
  %v213 = vshrl.u32 %v212, 7
  %v214 = vsub.s32 7, %v213
  %v215 = vrot.slane %v46, %v214
  %v216 = vlaneseq
  %v217 = vshrl.u32 %v216, 7
  %v218 = vsub.s32 0, %v217
  %v219 = vrot.slane %v47, %v218
  %v220 = vlaneseq
  %v221 = vshrl.u32 %v220, 7
  %v222 = vsub.s32 1, %v221
  %v223 = vrot.slane %v47, %v222
  %v224 = vlaneseq
  %v225 = vshrl.u32 %v224, 7
  %v226 = vsub.s32 2, %v225
  %v227 = vrot.slane %v47, %v226
  %v228 = vlaneseq
  %v229 = vshrl.u32 %v228, 7
  %v230 = vsub.s32 3, %v229
  %v231 = vrot.slane %v47, %v230
  %v232 = vlaneseq
  %v233 = vshrl.u32 %v232, 7
  %v234 = vsub.s32 4, %v233
  %v235 = vrot.slane %v47, %v234
  %v236 = vlaneseq
  %v237 = vshrl.u32 %v236, 7
  %v238 = vsub.s32 5, %v237
  %v239 = vrot.slane %v47, %v238
  %v240 = vlaneseq
  %v241 = vshrl.u32 %v240, 7
  %v242 = vsub.s32 6, %v241
  %v243 = vrot.slane %v47, %v242
  %v244 = vlaneseq
  %v245 = vshrl.u32 %v244, 7
  %v246 = vsub.s32 7, %v245
  %v247 = vrot.slane %v47, %v246
  %v248 = vlaneseq
  %v249 = vshrl.u32 %v248, 7
  %v250 = vsub.s32 0, %v249
  %v251 = vrot.slane %v48, %v250
  %v252 = vlaneseq
  %v253 = vshrl.u32 %v252, 7
  %v254 = vsub.s32 1, %v253
  %v255 = vrot.slane %v48, %v254
  %v256 = vlaneseq
  %v257 = vshrl.u32 %v256, 7
  %v258 = vsub.s32 2, %v257
  %v259 = vrot.slane %v48, %v258
  %v260 = vlaneseq
  %v261 = vshrl.u32 %v260, 7
  %v262 = vsub.s32 3, %v261
  %v263 = vrot.slane %v48, %v262
  %v264 = vlaneseq
  %v265 = vshrl.u32 %v264, 7
  %v266 = vsub.s32 4, %v265
  %v267 = vrot.slane %v48, %v266
  %v268 = vlaneseq
  %v269 = vshrl.u32 %v268, 7
  %v270 = vsub.s32 5, %v269
  %v271 = vrot.slane %v48, %v270
  %v272 = vlaneseq
  %v273 = vshrl.u32 %v272, 7
  %v274 = vsub.s32 6, %v273
  %v275 = vrot.slane %v48, %v274
  %v276 = vlaneseq
  %v277 = vshrl.u32 %v276, 7
  %v278 = vsub.s32 7, %v277
  %v279 = vrot.slane %v48, %v278
  %v280 = vcombine.low %v59, %v63
  %v281 = vcombine.low %v67, %v71
  %v282 = vcombine.low %v75, %v79
  %v283 = vcombine.low %v83, %v87
  %v284 = vcombine.low %v91, %v95
  %v285 = vcombine.low %v99, %v103
  %v286 = vcombine.low %v107, %v111
  %v287 = vcombine.low %v115, %v119
  %v288 = vcombine.low %v123, %v127
  %v289 = vcombine.low %v131, %v135
  %v290 = vcombine.low %v139, %v143
  %v291 = vcombine.low %v147, %v151
  %v292 = vcombine.low %v155, %v159
  %v293 = vcombine.low %v163, %v167
  %v294 = vcombine.low %v171, %v175
  %v295 = vcombine.low %v179, %v183
  %v296 = vcombine.low %v187, %v191
  %v297 = vcombine.low %v195, %v199
  %v298 = vcombine.low %v203, %v207
  %v299 = vcombine.low %v211, %v215
  %v300 = vcombine.low %v219, %v223
  %v301 = vcombine.low %v227, %v231
  %v302 = vcombine.low %v235, %v239
  %v303 = vcombine.low %v243, %v247
  %v304 = vcombine.low %v251, %v255
  %v305 = vcombine.low %v259, %v263
  %v306 = vcombine.low %v267, %v271
  %v307 = vcombine.low %v275, %v279
  %v336 = vmul.f32 %v14, %v280
  %v337 = vmul.f32 %v15, %v281
  %v338 = vmul.f32 %v16, %v282
  %v339 = vmul.f32 %v17, %v283
  %v340 = vmul.f32 %v18, %v284
  %v341 = vmul.f32 %v19, %v285
  %v342 = vmul.f32 %v20, %v286
  %v343 = vmul.f32 %v21, %v287
  %v344 = vmul.f32 %v22, %v288
  %v345 = vmul.f32 %v23, %v289
  %v346 = vmul.f32 %v24, %v290
  %v347 = vmul.f32 %v25, %v291
  %v348 = vmul.f32 %v26, %v292
  %v349 = vmul.f32 %v27, %v293
  %v350 = vmul.f32 %v28, %v294
  %v351 = vmul.f32 %v29, %v295
  %v352 = vmul.f32 %v30, %v296
  %v353 = vmul.f32 %v31, %v297
  %v354 = vmul.f32 %v32, %v298
  %v355 = vmul.f32 %v33, %v299
  %v356 = vmul.f32 %v34, %v300
  %v357 = vmul.f32 %v35, %v301
  %v358 = vmul.f32 %v36, %v302
  %v359 = vmul.f32 %v37, %v303
  %v360 = vmul.f32 %v38, %v304
  %v361 = vmul.f32 %v39, %v305
  %v362 = vmul.f32 %v40, %v306
  %v363 = vmul.f32 %v41, %v307
  %v364 = vld [vmem:[%s2] sm:$0xff]
  %v365 = vld [vmem:[%s2 + $0x8] sm:$0xff]
  %v366 = vld [vmem:[%s2 + $0x10] sm:$0xff]
  %v367 = vld [vmem:[%s2 + $0x18] sm:$0xff]
  %v368 = vld [vmem:[%s2 + $0x20] sm:$0xff]
  %v369 = vld [vmem:[%s2 + $0x28] sm:$0xff]
  %v370 = vld [vmem:[%s2 + $0x30] sm:$0xff]
  %v378 = vlaneseq
  %v379 = vshrl.u32 %v378, 7
  %v380 = vsub.s32 0, %v379
  %v381 = vrot.slane %v364, %v380
  %v382 = vlaneseq
  %v383 = vshrl.u32 %v382, 7
  %v384 = vsub.s32 1, %v383
  %v385 = vrot.slane %v364, %v384
  %v386 = vlaneseq
  %v387 = vshrl.u32 %v386, 7
  %v388 = vsub.s32 2, %v387
  %v389 = vrot.slane %v364, %v388
  %v390 = vlaneseq
  %v391 = vshrl.u32 %v390, 7
  %v392 = vsub.s32 3, %v391
  %v393 = vrot.slane %v364, %v392
  %v394 = vlaneseq
  %v395 = vshrl.u32 %v394, 7
  %v396 = vsub.s32 4, %v395
  %v397 = vrot.slane %v364, %v396
  %v398 = vlaneseq
  %v399 = vshrl.u32 %v398, 7
  %v400 = vsub.s32 5, %v399
  %v401 = vrot.slane %v364, %v400
  %v402 = vlaneseq
  %v403 = vshrl.u32 %v402, 7
  %v404 = vsub.s32 6, %v403
  %v405 = vrot.slane %v364, %v404
  %v406 = vlaneseq
  %v407 = vshrl.u32 %v406, 7
  %v408 = vsub.s32 7, %v407
  %v409 = vrot.slane %v364, %v408
  %v410 = vlaneseq
  %v411 = vshrl.u32 %v410, 7
  %v412 = vsub.s32 0, %v411
  %v413 = vrot.slane %v365, %v412
  %v414 = vlaneseq
  %v415 = vshrl.u32 %v414, 7
  %v416 = vsub.s32 1, %v415
  %v417 = vrot.slane %v365, %v416
  %v418 = vlaneseq
  %v419 = vshrl.u32 %v418, 7
  %v420 = vsub.s32 2, %v419
  %v421 = vrot.slane %v365, %v420
  %v422 = vlaneseq
  %v423 = vshrl.u32 %v422, 7
  %v424 = vsub.s32 3, %v423
  %v425 = vrot.slane %v365, %v424
  %v426 = vlaneseq
  %v427 = vshrl.u32 %v426, 7
  %v428 = vsub.s32 4, %v427
  %v429 = vrot.slane %v365, %v428
  %v430 = vlaneseq
  %v431 = vshrl.u32 %v430, 7
  %v432 = vsub.s32 5, %v431
  %v433 = vrot.slane %v365, %v432
  %v434 = vlaneseq
  %v435 = vshrl.u32 %v434, 7
  %v436 = vsub.s32 6, %v435
  %v437 = vrot.slane %v365, %v436
  %v438 = vlaneseq
  %v439 = vshrl.u32 %v438, 7
  %v440 = vsub.s32 7, %v439
  %v441 = vrot.slane %v365, %v440
  %v442 = vlaneseq
  %v443 = vshrl.u32 %v442, 7
  %v444 = vsub.s32 0, %v443
  %v445 = vrot.slane %v366, %v444
  %v446 = vlaneseq
  %v447 = vshrl.u32 %v446, 7
  %v448 = vsub.s32 1, %v447
  %v449 = vrot.slane %v366, %v448
  %v450 = vlaneseq
  %v451 = vshrl.u32 %v450, 7
  %v452 = vsub.s32 2, %v451
  %v453 = vrot.slane %v366, %v452
  %v454 = vlaneseq
  %v455 = vshrl.u32 %v454, 7
  %v456 = vsub.s32 3, %v455
  %v457 = vrot.slane %v366, %v456
  %v458 = vlaneseq
  %v459 = vshrl.u32 %v458, 7
  %v460 = vsub.s32 4, %v459
  %v461 = vrot.slane %v366, %v460
  %v462 = vlaneseq
  %v463 = vshrl.u32 %v462, 7
  %v464 = vsub.s32 5, %v463
  %v465 = vrot.slane %v366, %v464
  %v466 = vlaneseq
  %v467 = vshrl.u32 %v466, 7
  %v468 = vsub.s32 6, %v467
  %v469 = vrot.slane %v366, %v468
  %v470 = vlaneseq
  %v471 = vshrl.u32 %v470, 7
  %v472 = vsub.s32 7, %v471
  %v473 = vrot.slane %v366, %v472
  %v474 = vlaneseq
  %v475 = vshrl.u32 %v474, 7
  %v476 = vsub.s32 0, %v475
  %v477 = vrot.slane %v367, %v476
  %v478 = vlaneseq
  %v479 = vshrl.u32 %v478, 7
  %v480 = vsub.s32 1, %v479
  %v481 = vrot.slane %v367, %v480
  %v482 = vlaneseq
  %v483 = vshrl.u32 %v482, 7
  %v484 = vsub.s32 2, %v483
  %v485 = vrot.slane %v367, %v484
  %v486 = vlaneseq
  %v487 = vshrl.u32 %v486, 7
  %v488 = vsub.s32 3, %v487
  %v489 = vrot.slane %v367, %v488
  %v490 = vlaneseq
  %v491 = vshrl.u32 %v490, 7
  %v492 = vsub.s32 4, %v491
  %v493 = vrot.slane %v367, %v492
  %v494 = vlaneseq
  %v495 = vshrl.u32 %v494, 7
  %v496 = vsub.s32 5, %v495
  %v497 = vrot.slane %v367, %v496
  %v498 = vlaneseq
  %v499 = vshrl.u32 %v498, 7
  %v500 = vsub.s32 6, %v499
  %v501 = vrot.slane %v367, %v500
  %v502 = vlaneseq
  %v503 = vshrl.u32 %v502, 7
  %v504 = vsub.s32 7, %v503
  %v505 = vrot.slane %v367, %v504
  %v506 = vlaneseq
  %v507 = vshrl.u32 %v506, 7
  %v508 = vsub.s32 0, %v507
  %v509 = vrot.slane %v368, %v508
  %v510 = vlaneseq
  %v511 = vshrl.u32 %v510, 7
  %v512 = vsub.s32 1, %v511
  %v513 = vrot.slane %v368, %v512
  %v514 = vlaneseq
  %v515 = vshrl.u32 %v514, 7
  %v516 = vsub.s32 2, %v515
  %v517 = vrot.slane %v368, %v516
  %v518 = vlaneseq
  %v519 = vshrl.u32 %v518, 7
  %v520 = vsub.s32 3, %v519
  %v521 = vrot.slane %v368, %v520
  %v522 = vlaneseq
  %v523 = vshrl.u32 %v522, 7
  %v524 = vsub.s32 4, %v523
  %v525 = vrot.slane %v368, %v524
  %v526 = vlaneseq
  %v527 = vshrl.u32 %v526, 7
  %v528 = vsub.s32 5, %v527
  %v529 = vrot.slane %v368, %v528
  %v530 = vlaneseq
  %v531 = vshrl.u32 %v530, 7
  %v532 = vsub.s32 6, %v531
  %v533 = vrot.slane %v368, %v532
  %v534 = vlaneseq
  %v535 = vshrl.u32 %v534, 7
  %v536 = vsub.s32 7, %v535
  %v537 = vrot.slane %v368, %v536
  %v538 = vlaneseq
  %v539 = vshrl.u32 %v538, 7
  %v540 = vsub.s32 0, %v539
  %v541 = vrot.slane %v369, %v540
  %v542 = vlaneseq
  %v543 = vshrl.u32 %v542, 7
  %v544 = vsub.s32 1, %v543
  %v545 = vrot.slane %v369, %v544
  %v546 = vlaneseq
  %v547 = vshrl.u32 %v546, 7
  %v548 = vsub.s32 2, %v547
  %v549 = vrot.slane %v369, %v548
  %v550 = vlaneseq
  %v551 = vshrl.u32 %v550, 7
  %v552 = vsub.s32 3, %v551
  %v553 = vrot.slane %v369, %v552
  %v554 = vlaneseq
  %v555 = vshrl.u32 %v554, 7
  %v556 = vsub.s32 4, %v555
  %v557 = vrot.slane %v369, %v556
  %v558 = vlaneseq
  %v559 = vshrl.u32 %v558, 7
  %v560 = vsub.s32 5, %v559
  %v561 = vrot.slane %v369, %v560
  %v562 = vlaneseq
  %v563 = vshrl.u32 %v562, 7
  %v564 = vsub.s32 6, %v563
  %v565 = vrot.slane %v369, %v564
  %v566 = vlaneseq
  %v567 = vshrl.u32 %v566, 7
  %v568 = vsub.s32 7, %v567
  %v569 = vrot.slane %v369, %v568
  %v570 = vlaneseq
  %v571 = vshrl.u32 %v570, 7
  %v572 = vsub.s32 0, %v571
  %v573 = vrot.slane %v370, %v572
  %v574 = vlaneseq
  %v575 = vshrl.u32 %v574, 7
  %v576 = vsub.s32 1, %v575
  %v577 = vrot.slane %v370, %v576
  %v578 = vlaneseq
  %v579 = vshrl.u32 %v578, 7
  %v580 = vsub.s32 2, %v579
  %v581 = vrot.slane %v370, %v580
  %v582 = vlaneseq
  %v583 = vshrl.u32 %v582, 7
  %v584 = vsub.s32 3, %v583
  %v585 = vrot.slane %v370, %v584
  %v586 = vlaneseq
  %v587 = vshrl.u32 %v586, 7
  %v588 = vsub.s32 4, %v587
  %v589 = vrot.slane %v370, %v588
  %v590 = vlaneseq
  %v591 = vshrl.u32 %v590, 7
  %v592 = vsub.s32 5, %v591
  %v593 = vrot.slane %v370, %v592
  %v594 = vlaneseq
  %v595 = vshrl.u32 %v594, 7
  %v596 = vsub.s32 6, %v595
  %v597 = vrot.slane %v370, %v596
  %v598 = vlaneseq
  %v599 = vshrl.u32 %v598, 7
  %v600 = vsub.s32 7, %v599
  %v601 = vrot.slane %v370, %v600
  %v602 = vcombine.low %v381, %v385
  %v603 = vcombine.low %v389, %v393
  %v604 = vcombine.low %v397, %v401
  %v605 = vcombine.low %v405, %v409
  %v606 = vcombine.low %v413, %v417
  %v607 = vcombine.low %v421, %v425
  %v608 = vcombine.low %v429, %v433
  %v609 = vcombine.low %v437, %v441
  %v610 = vcombine.low %v445, %v449
  %v611 = vcombine.low %v453, %v457
  %v612 = vcombine.low %v461, %v465
  %v613 = vcombine.low %v469, %v473
  %v614 = vcombine.low %v477, %v481
  %v615 = vcombine.low %v485, %v489
  %v616 = vcombine.low %v493, %v497
  %v617 = vcombine.low %v501, %v505
  %v618 = vcombine.low %v509, %v513
  %v619 = vcombine.low %v517, %v521
  %v620 = vcombine.low %v525, %v529
  %v621 = vcombine.low %v533, %v537
  %v622 = vcombine.low %v541, %v545
  %v623 = vcombine.low %v549, %v553
  %v624 = vcombine.low %v557, %v561
  %v625 = vcombine.low %v565, %v569
  %v626 = vcombine.low %v573, %v577
  %v627 = vcombine.low %v581, %v585
  %v628 = vcombine.low %v589, %v593
  %v629 = vcombine.low %v597, %v601
  %v658 = vadd.f32 %v336, %v602
  %v659 = vadd.f32 %v337, %v603
  %v660 = vadd.f32 %v338, %v604
  %v661 = vadd.f32 %v339, %v605
  %v662 = vadd.f32 %v340, %v606
  %v663 = vadd.f32 %v341, %v607
  %v664 = vadd.f32 %v342, %v608
  %v665 = vadd.f32 %v343, %v609
  %v666 = vadd.f32 %v344, %v610
  %v667 = vadd.f32 %v345, %v611
  %v668 = vadd.f32 %v346, %v612
  %v669 = vadd.f32 %v347, %v613
  %v670 = vadd.f32 %v348, %v614
  %v671 = vadd.f32 %v349, %v615
  %v672 = vadd.f32 %v350, %v616
  %v673 = vadd.f32 %v351, %v617
  %v674 = vadd.f32 %v352, %v618
  %v675 = vadd.f32 %v353, %v619
  %v676 = vadd.f32 %v354, %v620
  %v677 = vadd.f32 %v355, %v621
  %v678 = vadd.f32 %v356, %v622
  %v679 = vadd.f32 %v357, %v623
  %v680 = vadd.f32 %v358, %v624
  %v681 = vadd.f32 %v359, %v625
  %v682 = vadd.f32 %v360, %v626
  %v683 = vadd.f32 %v361, %v627
  %v684 = vadd.f32 %v362, %v628
  %v685 = vadd.f32 %v363, %v629
  %vm686 = vcmp.ge.f32.partialorder %v658, 0.0
  %vm687 = vcmp.ge.f32.partialorder %v659, 0.0
  %vm688 = vcmp.ge.f32.partialorder %v660, 0.0
  %vm689 = vcmp.ge.f32.partialorder %v661, 0.0
  %vm690 = vcmp.ge.f32.partialorder %v662, 0.0
  %vm691 = vcmp.ge.f32.partialorder %v663, 0.0
  %vm692 = vcmp.ge.f32.partialorder %v664, 0.0
  %vm693 = vcmp.ge.f32.partialorder %v665, 0.0
  %vm694 = vcmp.ge.f32.partialorder %v666, 0.0
  %vm695 = vcmp.ge.f32.partialorder %v667, 0.0
  %vm696 = vcmp.ge.f32.partialorder %v668, 0.0
  %vm697 = vcmp.ge.f32.partialorder %v669, 0.0
  %vm698 = vcmp.ge.f32.partialorder %v670, 0.0
  %vm699 = vcmp.ge.f32.partialorder %v671, 0.0
  %vm700 = vcmp.ge.f32.partialorder %v672, 0.0
  %vm701 = vcmp.ge.f32.partialorder %v673, 0.0
  %vm702 = vcmp.ge.f32.partialorder %v674, 0.0
  %vm703 = vcmp.ge.f32.partialorder %v675, 0.0
  %vm704 = vcmp.ge.f32.partialorder %v676, 0.0
  %vm705 = vcmp.ge.f32.partialorder %v677, 0.0
  %vm706 = vcmp.ge.f32.partialorder %v678, 0.0
  %vm707 = vcmp.ge.f32.partialorder %v679, 0.0
  %vm708 = vcmp.ge.f32.partialorder %v680, 0.0
  %vm709 = vcmp.ge.f32.partialorder %v681, 0.0
  %vm710 = vcmp.ge.f32.partialorder %v682, 0.0
  %vm711 = vcmp.ge.f32.partialorder %v683, 0.0
  %vm712 = vcmp.ge.f32.partialorder %v684, 0.0
  %vm713 = vcmp.ge.f32.partialorder %v685, 0.0
  %v714 = vmul.f32 %v658, 0.2
  %v715 = vmul.f32 %v659, 0.2
  %v716 = vmul.f32 %v660, 0.2
  %v717 = vmul.f32 %v661, 0.2
  %v718 = vmul.f32 %v662, 0.2
  %v719 = vmul.f32 %v663, 0.2
  %v720 = vmul.f32 %v664, 0.2
  %v721 = vmul.f32 %v665, 0.2
  %v722 = vmul.f32 %v666, 0.2
  %v723 = vmul.f32 %v667, 0.2
  %v724 = vmul.f32 %v668, 0.2
  %v725 = vmul.f32 %v669, 0.2
  %v726 = vmul.f32 %v670, 0.2
  %v727 = vmul.f32 %v671, 0.2
  %v728 = vmul.f32 %v672, 0.2
  %v729 = vmul.f32 %v673, 0.2
  %v730 = vmul.f32 %v674, 0.2
  %v731 = vmul.f32 %v675, 0.2
  %v732 = vmul.f32 %v676, 0.2
  %v733 = vmul.f32 %v677, 0.2
  %v734 = vmul.f32 %v678, 0.2
  %v735 = vmul.f32 %v679, 0.2
  %v736 = vmul.f32 %v680, 0.2
  %v737 = vmul.f32 %v681, 0.2
  %v738 = vmul.f32 %v682, 0.2
  %v739 = vmul.f32 %v683, 0.2
  %v740 = vmul.f32 %v684, 0.2
  %v741 = vmul.f32 %v685, 0.2
  %v742 = vsel %vm686, %v658, %v714
  %v743 = vsel %vm687, %v659, %v715
  %v744 = vsel %vm688, %v660, %v716
  %v745 = vsel %vm689, %v661, %v717
  %v746 = vsel %vm690, %v662, %v718
  %v747 = vsel %vm691, %v663, %v719
  %v748 = vsel %vm692, %v664, %v720
  %v749 = vsel %vm693, %v665, %v721
  %v750 = vsel %vm694, %v666, %v722
  %v751 = vsel %vm695, %v667, %v723
  %v752 = vsel %vm696, %v668, %v724
  %v753 = vsel %vm697, %v669, %v725
  %v754 = vsel %vm698, %v670, %v726
  %v755 = vsel %vm699, %v671, %v727
  %v756 = vsel %vm700, %v672, %v728
  %v757 = vsel %vm701, %v673, %v729
  %v758 = vsel %vm702, %v674, %v730
  %v759 = vsel %vm703, %v675, %v731
  %v760 = vsel %vm704, %v676, %v732
  %v761 = vsel %vm705, %v677, %v733
  %v762 = vsel %vm706, %v678, %v734
  %v763 = vsel %vm707, %v679, %v735
  %v764 = vsel %vm708, %v680, %v736
  %v765 = vsel %vm709, %v681, %v737
  %v766 = vsel %vm710, %v682, %v738
  %v767 = vsel %vm711, %v683, %v739
  %v768 = vsel %vm712, %v684, %v740
  %v769 = vsel %vm713, %v685, %v741
  %770 = vst [vmem:[%s3] sm:$0xff] %v742
  %771 = vst [vmem:[%s3 + $0x8] sm:$0xff] %v743
  %772 = vst [vmem:[%s3 + $0x10] sm:$0xff] %v744
  %773 = vst [vmem:[%s3 + $0x18] sm:$0xff] %v745
  %774 = vst [vmem:[%s3 + $0x20] sm:$0xff] %v746
  %775 = vst [vmem:[%s3 + $0x28] sm:$0xff] %v747
  %776 = vst [vmem:[%s3 + $0x30] sm:$0xff] %v748
  %777 = vst [vmem:[%s3 + $0x38] sm:$0xff] %v749
  %778 = vst [vmem:[%s3 + $0x40] sm:$0xff] %v750
  %779 = vst [vmem:[%s3 + $0x48] sm:$0xff] %v751
  %780 = vst [vmem:[%s3 + $0x50] sm:$0xff] %v752
  %781 = vst [vmem:[%s3 + $0x58] sm:$0xff] %v753
  %782 = vst [vmem:[%s3 + $0x60] sm:$0xff] %v754
  %783 = vst [vmem:[%s3 + $0x68] sm:$0xff] %v755
  %784 = vst [vmem:[%s3 + $0x70] sm:$0xff] %v756
  %785 = vst [vmem:[%s3 + $0x78] sm:$0xff] %v757
  %786 = vst [vmem:[%s3 + $0x80] sm:$0xff] %v758
  %787 = vst [vmem:[%s3 + $0x88] sm:$0xff] %v759
  %788 = vst [vmem:[%s3 + $0x90] sm:$0xff] %v760
  %789 = vst [vmem:[%s3 + $0x98] sm:$0xff] %v761
  %790 = vst [vmem:[%s3 + $0xa0] sm:$0xff] %v762
  %791 = vst [vmem:[%s3 + $0xa8] sm:$0xff] %v763
  %792 = vst [vmem:[%s3 + $0xb0] sm:$0xff] %v764
  %793 = vst [vmem:[%s3 + $0xb8] sm:$0xff] %v765
  %794 = vst [vmem:[%s3 + $0xc0] sm:$0xff] %v766
  %795 = vst [vmem:[%s3 + $0xc8] sm:$0xff] %v767
  %796 = vst [vmem:[%s3 + $0xd0] sm:$0xff] %v768
  %797 = vst [vmem:[%s3 + $0xd8] sm:$0xff] %v769
  // Predicated region
  $region14: #{_pulse_core.5} parent=0 // pred_check
    _
  $region15: #{_pulse_core.5} parent=0 // pred_check_branch
    %799 = sbr.rel (0) target = $region17
  $region16: #{_pulse_core.5} parent=0 // pred_region
    _
  $region17: #{_pulse_core.5} parent=0 // pred_fallthru
    _
  // Predicated region
  $region18: #{_pulse_core.5} parent=0 // pred_check
    _
  $region19: #{_pulse_core.5} parent=0 // pred_check_branch
    %801 = sbr.rel (0) target = $region21
  $region20: #{_pulse_core.5} parent=0 // pred_region
    _
  $region21: #{_pulse_core.5} parent=0 // pred_fallthru
    _

// kernel: _pulse_core.7
$region0: #{_pulse_core.7}
  #allocation0 [shape = 'u32[]', space=smem, size = 0x4, offset = 0x4, fixed_abs, tag = 'smem constant byte address 0x4 - core index']
  #allocation1 [shape = 'u32[144,128]{1,0:T(1,128)}', space=vmem, size = 0x12000, scoped, tag = 'internal scratch']
  %s0 = inlined_call_operand.vmem [shape: f32[8,2048], index: 0, kind: input, shape index: {}]
  %s1 = inlined_call_operand.vmem [shape: f32[2048,128], index: 1, kind: input, shape index: {}]
  %s2 = inlined_call_operand.vmem [shape: f32[1,128], index: 2, kind: input, shape index: {}]
  %s3 = inlined_call_operand.vmem [shape: f32[8,128], index: 3, kind: output, shape index: {}]
  %s4 = sld [smem:[#allocation0]]
  $region22: #{_pulse_core.7} parent=0
    _
  %s6 = ssub.s32 1, %s4
  %s7 = scalar_select 0, %s6, %s4
  // Predicated region
  $region2: #{_pulse_core.7} parent=0 // pred_check
    _
  $region3: #{_pulse_core.7} parent=0 // pred_check_branch
    %9 = sbr.rel (0) target = $region5
  $region4: #{_pulse_core.7} parent=0 // pred_region
    _
  $region5: #{_pulse_core.7} parent=0 // pred_fallthru
    _
  // Predicated region
  $region6: #{_pulse_core.7} parent=0 // pred_check
    _
  $region7: #{_pulse_core.7} parent=0 // pred_check_branch
    %11 = sbr.rel (0) target = $region9
  $region8: #{_pulse_core.7} parent=0 // pred_region
    _
  $region9: #{_pulse_core.7} parent=0 // pred_fallthru
    _
  // Predicated region
  $region10: #{_pulse_core.7} parent=0 // pred_check
    _
  $region11: #{_pulse_core.7} parent=0 // pred_check_branch
    %13 = sbr.rel (0) target = $region13
  $region12: #{_pulse_core.7} parent=0 // pred_region
    _
  $region13: #{_pulse_core.7} parent=0 // pred_fallthru
    _
  %v14 = vld [vmem:[%s0] sm:$0xff]
  %v15 = vld [vmem:[%s0 + $0x8] sm:$0xff]
  %v16 = vld [vmem:[%s0 + $0x10] sm:$0xff]
  %v17 = vld [vmem:[%s0 + $0x18] sm:$0xff]
  %v18 = vld [vmem:[%s0 + $0x20] sm:$0xff]
  %v19 = vld [vmem:[%s0 + $0x28] sm:$0xff]
  %v20 = vld [vmem:[%s0 + $0x30] sm:$0xff]
  %v21 = vld [vmem:[%s0 + $0x38] sm:$0xff]
  %v22 = vld [vmem:[%s0 + $0x40] sm:$0xff]
  %v23 = vld [vmem:[%s0 + $0x48] sm:$0xff]
  %v24 = vld [vmem:[%s0 + $0x50] sm:$0xff]
  %v25 = vld [vmem:[%s0 + $0x58] sm:$0xff]
  %v26 = vld [vmem:[%s0 + $0x60] sm:$0xff]
  %v27 = vld [vmem:[%s0 + $0x68] sm:$0xff]
  %v28 = vld [vmem:[%s0 + $0x70] sm:$0xff]
  %v29 = vld [vmem:[%s0 + $0x78] sm:$0xff]
  %v30 = vld [vmem:[%s1] sm:$0xff]
  %v31 = vld [vmem:[%s1 + $0x8] sm:$0xff]
  %v32 = vld [vmem:[%s1 + $0x10] sm:$0xff]
  %v33 = vld [vmem:[%s1 + $0x18] sm:$0xff]
  %v34 = vld [vmem:[%s1 + $0x20] sm:$0xff]
  %v35 = vld [vmem:[%s1 + $0x28] sm:$0xff]
  %v36 = vld [vmem:[%s1 + $0x30] sm:$0xff]
  %v37 = vld [vmem:[%s1 + $0x38] sm:$0xff]
  %v38 = vld [vmem:[%s1 + $0x40] sm:$0xff]
  %v39 = vld [vmem:[%s1 + $0x48] sm:$0xff]
  %v40 = vld [vmem:[%s1 + $0x50] sm:$0xff]
  %v41 = vld [vmem:[%s1 + $0x58] sm:$0xff]
  %v42 = vld [vmem:[%s1 + $0x60] sm:$0xff]
  %v43 = vld [vmem:[%s1 + $0x68] sm:$0xff]
  %v44 = vld [vmem:[%s1 + $0x70] sm:$0xff]
  %v45 = vld [vmem:[%s1 + $0x78] sm:$0xff]
  %v46 = vld [vmem:[%s1 + $0x80] sm:$0xff]
  %v47 = vld [vmem:[%s1 + $0x88] sm:$0xff]
  %v48 = vld [vmem:[%s1 + $0x90] sm:$0xff]
  %v49 = vld [vmem:[%s1 + $0x98] sm:$0xff]
  %v50 = vld [vmem:[%s1 + $0xa0] sm:$0xff]
  %v51 = vld [vmem:[%s1 + $0xa8] sm:$0xff]
  %v52 = vld [vmem:[%s1 + $0xb0] sm:$0xff]
  %v53 = vld [vmem:[%s1 + $0xb8] sm:$0xff]
  %v54 = vld [vmem:[%s1 + $0xc0] sm:$0xff]
  %v55 = vld [vmem:[%s1 + $0xc8] sm:$0xff]
  %v56 = vld [vmem:[%s1 + $0xd0] sm:$0xff]
  %v57 = vld [vmem:[%s1 + $0xd8] sm:$0xff]
  %v58 = vld [vmem:[%s1 + $0xe0] sm:$0xff]
  %v59 = vld [vmem:[%s1 + $0xe8] sm:$0xff]
  %v60 = vld [vmem:[%s1 + $0xf0] sm:$0xff]
  %v61 = vld [vmem:[%s1 + $0xf8] sm:$0xff]
  %v62 = vld [vmem:[%s1 + $0x100] sm:$0xff]
  %v63 = vld [vmem:[%s1 + $0x108] sm:$0xff]
  %v64 = vld [vmem:[%s1 + $0x110] sm:$0xff]
  %v65 = vld [vmem:[%s1 + $0x118] sm:$0xff]
  %v66 = vld [vmem:[%s1 + $0x120] sm:$0xff]
  %v67 = vld [vmem:[%s1 + $0x128] sm:$0xff]
  %v68 = vld [vmem:[%s1 + $0x130] sm:$0xff]
  %v69 = vld [vmem:[%s1 + $0x138] sm:$0xff]
  %v70 = vld [vmem:[%s1 + $0x140] sm:$0xff]
  %v71 = vld [vmem:[%s1 + $0x148] sm:$0xff]
  %v72 = vld [vmem:[%s1 + $0x150] sm:$0xff]
  %v73 = vld [vmem:[%s1 + $0x158] sm:$0xff]
  %v74 = vld [vmem:[%s1 + $0x160] sm:$0xff]
  %v75 = vld [vmem:[%s1 + $0x168] sm:$0xff]
  %v76 = vld [vmem:[%s1 + $0x170] sm:$0xff]
  %v77 = vld [vmem:[%s1 + $0x178] sm:$0xff]
  %v78 = vld [vmem:[%s1 + $0x180] sm:$0xff]
  %v79 = vld [vmem:[%s1 + $0x188] sm:$0xff]
  %v80 = vld [vmem:[%s1 + $0x190] sm:$0xff]
  %v81 = vld [vmem:[%s1 + $0x198] sm:$0xff]
  %v82 = vld [vmem:[%s1 + $0x1a0] sm:$0xff]
  %v83 = vld [vmem:[%s1 + $0x1a8] sm:$0xff]
  %v84 = vld [vmem:[%s1 + $0x1b0] sm:$0xff]
  %v85 = vld [vmem:[%s1 + $0x1b8] sm:$0xff]
  %v86 = vld [vmem:[%s1 + $0x1c0] sm:$0xff]
  %v87 = vld [vmem:[%s1 + $0x1c8] sm:$0xff]
  %v88 = vld [vmem:[%s1 + $0x1d0] sm:$0xff]
  %v89 = vld [vmem:[%s1 + $0x1d8] sm:$0xff]
  %v90 = vld [vmem:[%s1 + $0x1e0] sm:$0xff]
  %v91 = vld [vmem:[%s1 + $0x1e8] sm:$0xff]
  %v92 = vld [vmem:[%s1 + $0x1f0] sm:$0xff]
  %v93 = vld [vmem:[%s1 + $0x1f8] sm:$0xff]
  %v94 = vld [vmem:[%s1 + $0x200] sm:$0xff]
  %v95 = vld [vmem:[%s1 + $0x208] sm:$0xff]
  %v96 = vld [vmem:[%s1 + $0x210] sm:$0xff]
  %v97 = vld [vmem:[%s1 + $0x218] sm:$0xff]
  %v98 = vld [vmem:[%s1 + $0x220] sm:$0xff]
  %v99 = vld [vmem:[%s1 + $0x228] sm:$0xff]
  %v100 = vld [vmem:[%s1 + $0x230] sm:$0xff]
  %v101 = vld [vmem:[%s1 + $0x238] sm:$0xff]
  %v102 = vld [vmem:[%s1 + $0x240] sm:$0xff]
  %v103 = vld [vmem:[%s1 + $0x248] sm:$0xff]
  %v104 = vld [vmem:[%s1 + $0x250] sm:$0xff]
  %v105 = vld [vmem:[%s1 + $0x258] sm:$0xff]
  %v106 = vld [vmem:[%s1 + $0x260] sm:$0xff]
  %v107 = vld [vmem:[%s1 + $0x268] sm:$0xff]
  %v108 = vld [vmem:[%s1 + $0x270] sm:$0xff]
  %v109 = vld [vmem:[%s1 + $0x278] sm:$0xff]
  %v110 = vld [vmem:[%s1 + $0x280] sm:$0xff]
  %v111 = vld [vmem:[%s1 + $0x288] sm:$0xff]
  %v112 = vld [vmem:[%s1 + $0x290] sm:$0xff]
  %v113 = vld [vmem:[%s1 + $0x298] sm:$0xff]
  %v114 = vld [vmem:[%s1 + $0x2a0] sm:$0xff]
  %v115 = vld [vmem:[%s1 + $0x2a8] sm:$0xff]
  %v116 = vld [vmem:[%s1 + $0x2b0] sm:$0xff]
  %v117 = vld [vmem:[%s1 + $0x2b8] sm:$0xff]
  %v118 = vld [vmem:[%s1 + $0x2c0] sm:$0xff]
  %v119 = vld [vmem:[%s1 + $0x2c8] sm:$0xff]
  %v120 = vld [vmem:[%s1 + $0x2d0] sm:$0xff]
  %v121 = vld [vmem:[%s1 + $0x2d8] sm:$0xff]
  %v122 = vld [vmem:[%s1 + $0x2e0] sm:$0xff]
  %v123 = vld [vmem:[%s1 + $0x2e8] sm:$0xff]
  %v124 = vld [vmem:[%s1 + $0x2f0] sm:$0xff]
  %v125 = vld [vmem:[%s1 + $0x2f8] sm:$0xff]
  %v126 = vld [vmem:[%s1 + $0x300] sm:$0xff]
  %v127 = vld [vmem:[%s1 + $0x308] sm:$0xff]
  %v128 = vld [vmem:[%s1 + $0x310] sm:$0xff]
  %v129 = vld [vmem:[%s1 + $0x318] sm:$0xff]
  %v130 = vld [vmem:[%s1 + $0x320] sm:$0xff]
  %v131 = vld [vmem:[%s1 + $0x328] sm:$0xff]
  %v132 = vld [vmem:[%s1 + $0x330] sm:$0xff]
  %v133 = vld [vmem:[%s1 + $0x338] sm:$0xff]
  %v134 = vld [vmem:[%s1 + $0x340] sm:$0xff]
  %v135 = vld [vmem:[%s1 + $0x348] sm:$0xff]
  %v136 = vld [vmem:[%s1 + $0x350] sm:$0xff]
  %v137 = vld [vmem:[%s1 + $0x358] sm:$0xff]
  %v138 = vld [vmem:[%s1 + $0x360] sm:$0xff]
  %v139 = vld [vmem:[%s1 + $0x368] sm:$0xff]
  %v140 = vld [vmem:[%s1 + $0x370] sm:$0xff]
  %v141 = vld [vmem:[%s1 + $0x378] sm:$0xff]
  %v142 = vld [vmem:[%s1 + $0x380] sm:$0xff]
  %v143 = vld [vmem:[%s1 + $0x388] sm:$0xff]
  %v144 = vld [vmem:[%s1 + $0x390] sm:$0xff]
  %v145 = vld [vmem:[%s1 + $0x398] sm:$0xff]
  %v146 = vld [vmem:[%s1 + $0x3a0] sm:$0xff]
  %v147 = vld [vmem:[%s1 + $0x3a8] sm:$0xff]
  %v148 = vld [vmem:[%s1 + $0x3b0] sm:$0xff]
  %v149 = vld [vmem:[%s1 + $0x3b8] sm:$0xff]
  %v150 = vld [vmem:[%s1 + $0x3c0] sm:$0xff]
  %v151 = vld [vmem:[%s1 + $0x3c8] sm:$0xff]
  %v152 = vld [vmem:[%s1 + $0x3d0] sm:$0xff]
  %v153 = vld [vmem:[%s1 + $0x3d8] sm:$0xff]
  %v154 = vld [vmem:[%s1 + $0x3e0] sm:$0xff]
  %v155 = vld [vmem:[%s1 + $0x3e8] sm:$0xff]
  %v156 = vld [vmem:[%s1 + $0x3f0] sm:$0xff]
  %v157 = vld [vmem:[%s1 + $0x3f8] sm:$0xff]
  %v158 = vld [vmem:[%s1 + $0x400] sm:$0xff]
  %v159 = vld [vmem:[%s1 + $0x408] sm:$0xff]
  %v160 = vld [vmem:[%s1 + $0x410] sm:$0xff]
  %v161 = vld [vmem:[%s1 + $0x418] sm:$0xff]
  %v162 = vld [vmem:[%s1 + $0x420] sm:$0xff]
  %v163 = vld [vmem:[%s1 + $0x428] sm:$0xff]
  %v164 = vld [vmem:[%s1 + $0x430] sm:$0xff]
  %v165 = vld [vmem:[%s1 + $0x438] sm:$0xff]
  %v166 = vld [vmem:[%s1 + $0x440] sm:$0xff]
  %v167 = vld [vmem:[%s1 + $0x448] sm:$0xff]
  %v168 = vld [vmem:[%s1 + $0x450] sm:$0xff]
  %v169 = vld [vmem:[%s1 + $0x458] sm:$0xff]
  %v170 = vld [vmem:[%s1 + $0x460] sm:$0xff]
  %v171 = vld [vmem:[%s1 + $0x468] sm:$0xff]
  %v172 = vld [vmem:[%s1 + $0x470] sm:$0xff]
  %v173 = vld [vmem:[%s1 + $0x478] sm:$0xff]
  %v174 = vld [vmem:[%s1 + $0x480] sm:$0xff]
  %v175 = vld [vmem:[%s1 + $0x488] sm:$0xff]
  %v176 = vld [vmem:[%s1 + $0x490] sm:$0xff]
  %v177 = vld [vmem:[%s1 + $0x498] sm:$0xff]
  %v178 = vld [vmem:[%s1 + $0x4a0] sm:$0xff]
  %v179 = vld [vmem:[%s1 + $0x4a8] sm:$0xff]
  %v180 = vld [vmem:[%s1 + $0x4b0] sm:$0xff]
  %v181 = vld [vmem:[%s1 + $0x4b8] sm:$0xff]
  %v182 = vld [vmem:[%s1 + $0x4c0] sm:$0xff]
  %v183 = vld [vmem:[%s1 + $0x4c8] sm:$0xff]
  %v184 = vld [vmem:[%s1 + $0x4d0] sm:$0xff]
  %v185 = vld [vmem:[%s1 + $0x4d8] sm:$0xff]
  %v186 = vld [vmem:[%s1 + $0x4e0] sm:$0xff]
  %v187 = vld [vmem:[%s1 + $0x4e8] sm:$0xff]
  %v188 = vld [vmem:[%s1 + $0x4f0] sm:$0xff]
  %v189 = vld [vmem:[%s1 + $0x4f8] sm:$0xff]
  %v190 = vld [vmem:[%s1 + $0x500] sm:$0xff]
  %v191 = vld [vmem:[%s1 + $0x508] sm:$0xff]
  %v192 = vld [vmem:[%s1 + $0x510] sm:$0xff]
  %v193 = vld [vmem:[%s1 + $0x518] sm:$0xff]
  %v194 = vld [vmem:[%s1 + $0x520] sm:$0xff]
  %v195 = vld [vmem:[%s1 + $0x528] sm:$0xff]
  %v196 = vld [vmem:[%s1 + $0x530] sm:$0xff]
  %v197 = vld [vmem:[%s1 + $0x538] sm:$0xff]
  %v198 = vld [vmem:[%s1 + $0x540] sm:$0xff]
  %v199 = vld [vmem:[%s1 + $0x548] sm:$0xff]
  %v200 = vld [vmem:[%s1 + $0x550] sm:$0xff]
  %v201 = vld [vmem:[%s1 + $0x558] sm:$0xff]
  %v202 = vld [vmem:[%s1 + $0x560] sm:$0xff]
  %v203 = vld [vmem:[%s1 + $0x568] sm:$0xff]
  %v204 = vld [vmem:[%s1 + $0x570] sm:$0xff]
  %v205 = vld [vmem:[%s1 + $0x578] sm:$0xff]
  %v206 = vld [vmem:[%s1 + $0x580] sm:$0xff]
  %v207 = vld [vmem:[%s1 + $0x588] sm:$0xff]
  %v208 = vld [vmem:[%s1 + $0x590] sm:$0xff]
  %v209 = vld [vmem:[%s1 + $0x598] sm:$0xff]
  %v210 = vld [vmem:[%s1 + $0x5a0] sm:$0xff]
  %v211 = vld [vmem:[%s1 + $0x5a8] sm:$0xff]
  %v212 = vld [vmem:[%s1 + $0x5b0] sm:$0xff]
  %v213 = vld [vmem:[%s1 + $0x5b8] sm:$0xff]
  %v214 = vld [vmem:[%s1 + $0x5c0] sm:$0xff]
  %v215 = vld [vmem:[%s1 + $0x5c8] sm:$0xff]
  %v216 = vld [vmem:[%s1 + $0x5d0] sm:$0xff]
  %v217 = vld [vmem:[%s1 + $0x5d8] sm:$0xff]
  %v218 = vld [vmem:[%s1 + $0x5e0] sm:$0xff]
  %v219 = vld [vmem:[%s1 + $0x5e8] sm:$0xff]
  %v220 = vld [vmem:[%s1 + $0x5f0] sm:$0xff]
  %v221 = vld [vmem:[%s1 + $0x5f8] sm:$0xff]
  %v222 = vld [vmem:[%s1 + $0x600] sm:$0xff]
  %v223 = vld [vmem:[%s1 + $0x608] sm:$0xff]
  %v224 = vld [vmem:[%s1 + $0x610] sm:$0xff]
  %v225 = vld [vmem:[%s1 + $0x618] sm:$0xff]
  %v226 = vld [vmem:[%s1 + $0x620] sm:$0xff]
  %v227 = vld [vmem:[%s1 + $0x628] sm:$0xff]
  %v228 = vld [vmem:[%s1 + $0x630] sm:$0xff]
  %v229 = vld [vmem:[%s1 + $0x638] sm:$0xff]
  %v230 = vld [vmem:[%s1 + $0x640] sm:$0xff]
  %v231 = vld [vmem:[%s1 + $0x648] sm:$0xff]
  %v232 = vld [vmem:[%s1 + $0x650] sm:$0xff]
  %v233 = vld [vmem:[%s1 + $0x658] sm:$0xff]
  %v234 = vld [vmem:[%s1 + $0x660] sm:$0xff]
  %v235 = vld [vmem:[%s1 + $0x668] sm:$0xff]
  %v236 = vld [vmem:[%s1 + $0x670] sm:$0xff]
  %v237 = vld [vmem:[%s1 + $0x678] sm:$0xff]
  %v238 = vld [vmem:[%s1 + $0x680] sm:$0xff]
  %v239 = vld [vmem:[%s1 + $0x688] sm:$0xff]
  %v240 = vld [vmem:[%s1 + $0x690] sm:$0xff]
  %v241 = vld [vmem:[%s1 + $0x698] sm:$0xff]
  %v242 = vld [vmem:[%s1 + $0x6a0] sm:$0xff]
  %v243 = vld [vmem:[%s1 + $0x6a8] sm:$0xff]
  %v244 = vld [vmem:[%s1 + $0x6b0] sm:$0xff]
  %v245 = vld [vmem:[%s1 + $0x6b8] sm:$0xff]
  %v246 = vld [vmem:[%s1 + $0x6c0] sm:$0xff]
  %v247 = vld [vmem:[%s1 + $0x6c8] sm:$0xff]
  %v248 = vld [vmem:[%s1 + $0x6d0] sm:$0xff]
  %v249 = vld [vmem:[%s1 + $0x6d8] sm:$0xff]
  %v250 = vld [vmem:[%s1 + $0x6e0] sm:$0xff]
  %v251 = vld [vmem:[%s1 + $0x6e8] sm:$0xff]
  %v252 = vld [vmem:[%s1 + $0x6f0] sm:$0xff]
  %v253 = vld [vmem:[%s1 + $0x6f8] sm:$0xff]
  %v254 = vld [vmem:[%s1 + $0x700] sm:$0xff]
  %v255 = vld [vmem:[%s1 + $0x708] sm:$0xff]
  %v256 = vld [vmem:[%s1 + $0x710] sm:$0xff]
  %v257 = vld [vmem:[%s1 + $0x718] sm:$0xff]
  %v258 = vld [vmem:[%s1 + $0x720] sm:$0xff]
  %v259 = vld [vmem:[%s1 + $0x728] sm:$0xff]
  %v260 = vld [vmem:[%s1 + $0x730] sm:$0xff]
  %v261 = vld [vmem:[%s1 + $0x738] sm:$0xff]
  %v262 = vld [vmem:[%s1 + $0x740] sm:$0xff]
  %v263 = vld [vmem:[%s1 + $0x748] sm:$0xff]
  %v264 = vld [vmem:[%s1 + $0x750] sm:$0xff]
  %v265 = vld [vmem:[%s1 + $0x758] sm:$0xff]
  %v266 = vld [vmem:[%s1 + $0x760] sm:$0xff]
  %v267 = vld [vmem:[%s1 + $0x768] sm:$0xff]
  %v268 = vld [vmem:[%s1 + $0x770] sm:$0xff]
  %v269 = vld [vmem:[%s1 + $0x778] sm:$0xff]
  %v270 = vld [vmem:[%s1 + $0x780] sm:$0xff]
  %v271 = vld [vmem:[%s1 + $0x788] sm:$0xff]
  %v272 = vld [vmem:[%s1 + $0x790] sm:$0xff]
  %v273 = vld [vmem:[%s1 + $0x798] sm:$0xff]
  %v274 = vld [vmem:[%s1 + $0x7a0] sm:$0xff]
  %v275 = vld [vmem:[%s1 + $0x7a8] sm:$0xff]
  %v276 = vld [vmem:[%s1 + $0x7b0] sm:$0xff]
  %v277 = vld [vmem:[%s1 + $0x7b8] sm:$0xff]
  %v278 = vld [vmem:[%s1 + $0x7c0] sm:$0xff]
  %v279 = vld [vmem:[%s1 + $0x7c8] sm:$0xff]
  %v280 = vld [vmem:[%s1 + $0x7d0] sm:$0xff]
  %v281 = vld [vmem:[%s1 + $0x7d8] sm:$0xff]
  %v282 = vld [vmem:[%s1 + $0x7e0] sm:$0xff]
  %v283 = vld [vmem:[%s1 + $0x7e8] sm:$0xff]
  %v284 = vld [vmem:[%s1 + $0x7f0] sm:$0xff]
  %v285 = vld [vmem:[%s1 + $0x7f8] sm:$0xff]
  %v286 = vld [vmem:[%s2] sm:$0x1]
  %v288 = vlaneseq
  %v289 = vshrl.u32 %v288, 7
  %v290 = vsub.s32 0, %v289
  %v291 = vrot.slane %v286, %v290
  %293 = vmatprep.subr.mxu0 0.0
  %294 = vmatpush1.msra.mxu0 %v30
  %295 = vmatprep.subr.mxu0 0.0
  %296 = vmatpush1.msra.mxu0 %v31
  %297 = vmatprep.subr.mxu0 0.0
  %298 = vmatpush1.msra.mxu0 %v32
  %299 = vmatprep.subr.mxu0 0.0
  %300 = vmatpush1.msra.mxu0 %v33
  %301 = vmatprep.subr.mxu0 0.0
  %302 = vmatpush1.msra.mxu0 %v34
  %303 = vmatprep.subr.mxu0 0.0
  %304 = vmatpush1.msra.mxu0 %v35
  %305 = vmatprep.subr.mxu0 0.0
  %306 = vmatpush1.msra.mxu0 %v36
  %307 = vmatprep.subr.mxu0 0.0
  %308 = vmatpush1.msra.mxu0 %v37
  %309 = vmatprep.subr.mxu0 0.0
  %310 = vmatpush1.msra.mxu0 %v38
  %311 = vmatprep.subr.mxu0 0.0
  %312 = vmatpush1.msra.mxu0 %v39
  %313 = vmatprep.subr.mxu0 0.0
  %314 = vmatpush1.msra.mxu0 %v40
  %315 = vmatprep.subr.mxu0 0.0
  %316 = vmatpush1.msra.mxu0 %v41
  %317 = vmatprep.subr.mxu0 0.0
  %318 = vmatpush1.msra.mxu0 %v42
  %319 = vmatprep.subr.mxu0 0.0
  %320 = vmatpush1.msra.mxu0 %v43
  %321 = vmatprep.subr.mxu0 0.0
  %322 = vmatpush1.msra.mxu0 %v44
  %323 = vmatprep.subr.mxu0 0.0
  %324 = vmatpush1.msra.mxu0 %v45
  %325 = vmatprep.subr.mxu0 0.0
  %326 = vmatpush1.msra.mxu0 %v46
  %327 = vmatprep.subr.mxu0 0.0
  %328 = vmatpush1.msra.mxu0 %v47
  %329 = vmatprep.subr.mxu0 0.0
  %330 = vmatpush1.msra.mxu0 %v48
  %331 = vmatprep.subr.mxu0 0.0
  %332 = vmatpush1.msra.mxu0 %v49
  %333 = vmatprep.subr.mxu0 0.0
  %334 = vmatpush1.msra.mxu0 %v50
  %335 = vmatprep.subr.mxu0 0.0
  %336 = vmatpush1.msra.mxu0 %v51
  %337 = vmatprep.subr.mxu0 0.0
  %338 = vmatpush1.msra.mxu0 %v52
  %339 = vmatprep.subr.mxu0 0.0
  %340 = vmatpush1.msra.mxu0 %v53
  %341 = vmatprep.subr.mxu0 0.0
  %342 = vmatpush1.msra.mxu0 %v54
  %343 = vmatprep.subr.mxu0 0.0
  %344 = vmatpush1.msra.mxu0 %v55
  %345 = vmatprep.subr.mxu0 0.0
  %346 = vmatpush1.msra.mxu0 %v56
  %347 = vmatprep.subr.mxu0 0.0
  %348 = vmatpush1.msra.mxu0 %v57
  %349 = vmatprep.subr.mxu0 0.0
  %350 = vmatpush1.msra.mxu0 %v58
  %351 = vmatprep.subr.mxu0 0.0
  %352 = vmatpush1.msra.mxu0 %v59
  %353 = vmatprep.subr.mxu0 0.0
  %354 = vmatpush1.msra.mxu0 %v60
  %355 = vmatprep.subr.mxu0 0.0
  %356 = vmatpush1.msra.mxu0 %v61
  %357 = vmatprep.mubr.f32.mxu0 %v15
  %358 = vmatmul.mubr.f32.gmra.mrb[0].mxu0 %v14
  %v359 = vpop.f32.mrb[0].mxu0
  %v360 = vadd.f32 %v291, %v359
  %v361 = vpop.f32.mrb[0].mxu0
  %362 = vdwg.mxu0
  %363 = vmatprep.subr.mxu0 0.0
  %364 = vmatpush1.msra.mxu0 %v62
  %365 = vmatprep.subr.mxu0 0.0
  %366 = vmatpush1.msra.mxu0 %v63
  %367 = vmatprep.subr.mxu0 0.0
  %368 = vmatpush1.msra.mxu0 %v64
  %369 = vmatprep.subr.mxu0 0.0
  %370 = vmatpush1.msra.mxu0 %v65
  %371 = vmatprep.subr.mxu0 0.0
  %372 = vmatpush1.msra.mxu0 %v66
  %373 = vmatprep.subr.mxu0 0.0
  %374 = vmatpush1.msra.mxu0 %v67
  %375 = vmatprep.subr.mxu0 0.0
  %376 = vmatpush1.msra.mxu0 %v68
  %377 = vmatprep.subr.mxu0 0.0
  %378 = vmatpush1.msra.mxu0 %v69
  %379 = vmatprep.subr.mxu0 0.0
  %380 = vmatpush1.msra.mxu0 %v70
  %381 = vmatprep.subr.mxu0 0.0
  %382 = vmatpush1.msra.mxu0 %v71
  %383 = vmatprep.subr.mxu0 0.0
  %384 = vmatpush1.msra.mxu0 %v72
  %385 = vmatprep.subr.mxu0 0.0
  %386 = vmatpush1.msra.mxu0 %v73
  %387 = vmatprep.subr.mxu0 0.0
  %388 = vmatpush1.msra.mxu0 %v74
  %389 = vmatprep.subr.mxu0 0.0
  %390 = vmatpush1.msra.mxu0 %v75
  %391 = vmatprep.subr.mxu0 0.0
  %392 = vmatpush1.msra.mxu0 %v76
  %393 = vmatprep.subr.mxu0 0.0
  %394 = vmatpush1.msra.mxu0 %v77
  %395 = vmatprep.subr.mxu0 0.0
  %396 = vmatpush1.msra.mxu0 %v78
  %397 = vmatprep.subr.mxu0 0.0
  %398 = vmatpush1.msra.mxu0 %v79
  %399 = vmatprep.subr.mxu0 0.0
  %400 = vmatpush1.msra.mxu0 %v80
  %401 = vmatprep.subr.mxu0 0.0
  %402 = vmatpush1.msra.mxu0 %v81
  %403 = vmatprep.subr.mxu0 0.0
  %404 = vmatpush1.msra.mxu0 %v82
  %405 = vmatprep.subr.mxu0 0.0
  %406 = vmatpush1.msra.mxu0 %v83
  %407 = vmatprep.subr.mxu0 0.0
  %408 = vmatpush1.msra.mxu0 %v84
  %409 = vmatprep.subr.mxu0 0.0
  %410 = vmatpush1.msra.mxu0 %v85
  %411 = vmatprep.subr.mxu0 0.0
  %412 = vmatpush1.msra.mxu0 %v86
  %413 = vmatprep.subr.mxu0 0.0
  %414 = vmatpush1.msra.mxu0 %v87
  %415 = vmatprep.subr.mxu0 0.0
  %416 = vmatpush1.msra.mxu0 %v88
  %417 = vmatprep.subr.mxu0 0.0
  %418 = vmatpush1.msra.mxu0 %v89
  %419 = vmatprep.subr.mxu0 0.0
  %420 = vmatpush1.msra.mxu0 %v90
  %421 = vmatprep.subr.mxu0 0.0
  %422 = vmatpush1.msra.mxu0 %v91
  %423 = vmatprep.subr.mxu0 0.0
  %424 = vmatpush1.msra.mxu0 %v92
  %425 = vmatprep.subr.mxu0 0.0
  %426 = vmatpush1.msra.mxu0 %v93
  %427 = vmatprep.mubr.f32.mxu0 %v17
  %428 = vmatmul.mubr.f32.gmra.mrb[0].mxu0 %v16
  %v429 = vpop.f32.mrb[0].mxu0
  %v430 = vadd.f32 %v360, %v429
  %v431 = vpop.f32.mrb[0].mxu0
  %432 = vdwg.mxu0
  %433 = vmatprep.subr.mxu0 0.0
  %434 = vmatpush1.msra.mxu0 %v94
  %435 = vmatprep.subr.mxu0 0.0
  %436 = vmatpush1.msra.mxu0 %v95
  %437 = vmatprep.subr.mxu0 0.0
  %438 = vmatpush1.msra.mxu0 %v96
  %439 = vmatprep.subr.mxu0 0.0
  %440 = vmatpush1.msra.mxu0 %v97
  %441 = vmatprep.subr.mxu0 0.0
  %442 = vmatpush1.msra.mxu0 %v98
  %443 = vmatprep.subr.mxu0 0.0
  %444 = vmatpush1.msra.mxu0 %v99
  %445 = vmatprep.subr.mxu0 0.0
  %446 = vmatpush1.msra.mxu0 %v100
  %447 = vmatprep.subr.mxu0 0.0
  %448 = vmatpush1.msra.mxu0 %v101
  %449 = vmatprep.subr.mxu0 0.0
  %450 = vmatpush1.msra.mxu0 %v102
  %451 = vmatprep.subr.mxu0 0.0
  %452 = vmatpush1.msra.mxu0 %v103
  %453 = vmatprep.subr.mxu0 0.0
  %454 = vmatpush1.msra.mxu0 %v104
  %455 = vmatprep.subr.mxu0 0.0
  %456 = vmatpush1.msra.mxu0 %v105
  %457 = vmatprep.subr.mxu0 0.0
  %458 = vmatpush1.msra.mxu0 %v106
  %459 = vmatprep.subr.mxu0 0.0
  %460 = vmatpush1.msra.mxu0 %v107
  %461 = vmatprep.subr.mxu0 0.0
  %462 = vmatpush1.msra.mxu0 %v108
  %463 = vmatprep.subr.mxu0 0.0
  %464 = vmatpush1.msra.mxu0 %v109
  %465 = vmatprep.subr.mxu0 0.0
  %466 = vmatpush1.msra.mxu0 %v110
  %467 = vmatprep.subr.mxu0 0.0
  %468 = vmatpush1.msra.mxu0 %v111
  %469 = vmatprep.subr.mxu0 0.0
  %470 = vmatpush1.msra.mxu0 %v112
  %471 = vmatprep.subr.mxu0 0.0
  %472 = vmatpush1.msra.mxu0 %v113
  %473 = vmatprep.subr.mxu0 0.0
  %474 = vmatpush1.msra.mxu0 %v114
  %475 = vmatprep.subr.mxu0 0.0
  %476 = vmatpush1.msra.mxu0 %v115
  %477 = vmatprep.subr.mxu0 0.0
  %478 = vmatpush1.msra.mxu0 %v116
  %479 = vmatprep.subr.mxu0 0.0
  %480 = vmatpush1.msra.mxu0 %v117
  %481 = vmatprep.subr.mxu0 0.0
  %482 = vmatpush1.msra.mxu0 %v118
  %483 = vmatprep.subr.mxu0 0.0
  %484 = vmatpush1.msra.mxu0 %v119
  %485 = vmatprep.subr.mxu0 0.0
  %486 = vmatpush1.msra.mxu0 %v120
  %487 = vmatprep.subr.mxu0 0.0
  %488 = vmatpush1.msra.mxu0 %v121
  %489 = vmatprep.subr.mxu0 0.0
  %490 = vmatpush1.msra.mxu0 %v122
  %491 = vmatprep.subr.mxu0 0.0
  %492 = vmatpush1.msra.mxu0 %v123
  %493 = vmatprep.subr.mxu0 0.0
  %494 = vmatpush1.msra.mxu0 %v124
  %495 = vmatprep.subr.mxu0 0.0
  %496 = vmatpush1.msra.mxu0 %v125
  %497 = vmatprep.mubr.f32.mxu0 %v19
  %498 = vmatmul.mubr.f32.gmra.mrb[0].mxu0 %v18
  %v499 = vpop.f32.mrb[0].mxu0
  %v500 = vadd.f32 %v430, %v499
  %v501 = vpop.f32.mrb[0].mxu0
  %502 = vdwg.mxu0
  %503 = vmatprep.subr.mxu0 0.0
  %504 = vmatpush1.msra.mxu0 %v126
  %505 = vmatprep.subr.mxu0 0.0
  %506 = vmatpush1.msra.mxu0 %v127
  %507 = vmatprep.subr.mxu0 0.0
  %508 = vmatpush1.msra.mxu0 %v128
  %509 = vmatprep.subr.mxu0 0.0
  %510 = vmatpush1.msra.mxu0 %v129
  %511 = vmatprep.subr.mxu0 0.0
  %512 = vmatpush1.msra.mxu0 %v130
  %513 = vmatprep.subr.mxu0 0.0
  %514 = vmatpush1.msra.mxu0 %v131
  %515 = vmatprep.subr.mxu0 0.0
  %516 = vmatpush1.msra.mxu0 %v132
  %517 = vmatprep.subr.mxu0 0.0
  %518 = vmatpush1.msra.mxu0 %v133
  %519 = vmatprep.subr.mxu0 0.0
  %520 = vmatpush1.msra.mxu0 %v134
  %521 = vmatprep.subr.mxu0 0.0
  %522 = vmatpush1.msra.mxu0 %v135
  %523 = vmatprep.subr.mxu0 0.0
  %524 = vmatpush1.msra.mxu0 %v136
  %525 = vmatprep.subr.mxu0 0.0
  %526 = vmatpush1.msra.mxu0 %v137
  %527 = vmatprep.subr.mxu0 0.0
  %528 = vmatpush1.msra.mxu0 %v138
  %529 = vmatprep.subr.mxu0 0.0
  %530 = vmatpush1.msra.mxu0 %v139
  %531 = vmatprep.subr.mxu0 0.0
  %532 = vmatpush1.msra.mxu0 %v140
  %533 = vmatprep.subr.mxu0 0.0
  %534 = vmatpush1.msra.mxu0 %v141
  %535 = vmatprep.subr.mxu0 0.0
  %536 = vmatpush1.msra.mxu0 %v142
  %537 = vmatprep.subr.mxu0 0.0
  %538 = vmatpush1.msra.mxu0 %v143
  %539 = vmatprep.subr.mxu0 0.0
  %540 = vmatpush1.msra.mxu0 %v144
  %541 = vmatprep.subr.mxu0 0.0
  %542 = vmatpush1.msra.mxu0 %v145
  %543 = vmatprep.subr.mxu0 0.0
  %544 = vmatpush1.msra.mxu0 %v146
  %545 = vmatprep.subr.mxu0 0.0
  %546 = vmatpush1.msra.mxu0 %v147
  %547 = vmatprep.subr.mxu0 0.0
  %548 = vmatpush1.msra.mxu0 %v148
  %549 = vmatprep.subr.mxu0 0.0
  %550 = vmatpush1.msra.mxu0 %v149
  %551 = vmatprep.subr.mxu0 0.0
  %552 = vmatpush1.msra.mxu0 %v150
  %553 = vmatprep.subr.mxu0 0.0
  %554 = vmatpush1.msra.mxu0 %v151
  %555 = vmatprep.subr.mxu0 0.0
  %556 = vmatpush1.msra.mxu0 %v152
  %557 = vmatprep.subr.mxu0 0.0
  %558 = vmatpush1.msra.mxu0 %v153
  %559 = vmatprep.subr.mxu0 0.0
  %560 = vmatpush1.msra.mxu0 %v154
  %561 = vmatprep.subr.mxu0 0.0
  %562 = vmatpush1.msra.mxu0 %v155
  %563 = vmatprep.subr.mxu0 0.0
  %564 = vmatpush1.msra.mxu0 %v156
  %565 = vmatprep.subr.mxu0 0.0
  %566 = vmatpush1.msra.mxu0 %v157
  %567 = vmatprep.mubr.f32.mxu0 %v21
  %568 = vmatmul.mubr.f32.gmra.mrb[0].mxu0 %v20
  %v569 = vpop.f32.mrb[0].mxu0
  %v570 = vadd.f32 %v500, %v569
  %v571 = vpop.f32.mrb[0].mxu0
  %572 = vdwg.mxu0
  %573 = vmatprep.subr.mxu0 0.0
  %574 = vmatpush1.msra.mxu0 %v158
  %575 = vmatprep.subr.mxu0 0.0
  %576 = vmatpush1.msra.mxu0 %v159
  %577 = vmatprep.subr.mxu0 0.0
  %578 = vmatpush1.msra.mxu0 %v160
  %579 = vmatprep.subr.mxu0 0.0
  %580 = vmatpush1.msra.mxu0 %v161
  %581 = vmatprep.subr.mxu0 0.0
  %582 = vmatpush1.msra.mxu0 %v162
  %583 = vmatprep.subr.mxu0 0.0
  %584 = vmatpush1.msra.mxu0 %v163
  %585 = vmatprep.subr.mxu0 0.0
  %586 = vmatpush1.msra.mxu0 %v164
  %587 = vmatprep.subr.mxu0 0.0
  %588 = vmatpush1.msra.mxu0 %v165
  %589 = vmatprep.subr.mxu0 0.0
  %590 = vmatpush1.msra.mxu0 %v166
  %591 = vmatprep.subr.mxu0 0.0
  %592 = vmatpush1.msra.mxu0 %v167
  %593 = vmatprep.subr.mxu0 0.0
  %594 = vmatpush1.msra.mxu0 %v168
  %595 = vmatprep.subr.mxu0 0.0
  %596 = vmatpush1.msra.mxu0 %v169
  %597 = vmatprep.subr.mxu0 0.0
  %598 = vmatpush1.msra.mxu0 %v170
  %599 = vmatprep.subr.mxu0 0.0
  %600 = vmatpush1.msra.mxu0 %v171
  %601 = vmatprep.subr.mxu0 0.0
  %602 = vmatpush1.msra.mxu0 %v172
  %603 = vmatprep.subr.mxu0 0.0
  %604 = vmatpush1.msra.mxu0 %v173
  %605 = vmatprep.subr.mxu0 0.0
  %606 = vmatpush1.msra.mxu0 %v174
  %607 = vmatprep.subr.mxu0 0.0
  %608 = vmatpush1.msra.mxu0 %v175
  %609 = vmatprep.subr.mxu0 0.0
  %610 = vmatpush1.msra.mxu0 %v176
  %611 = vmatprep.subr.mxu0 0.0
  %612 = vmatpush1.msra.mxu0 %v177
  %613 = vmatprep.subr.mxu0 0.0
  %614 = vmatpush1.msra.mxu0 %v178
  %615 = vmatprep.subr.mxu0 0.0
  %616 = vmatpush1.msra.mxu0 %v179
  %617 = vmatprep.subr.mxu0 0.0
  %618 = vmatpush1.msra.mxu0 %v180
  %619 = vmatprep.subr.mxu0 0.0
  %620 = vmatpush1.msra.mxu0 %v181
  %621 = vmatprep.subr.mxu0 0.0
  %622 = vmatpush1.msra.mxu0 %v182
  %623 = vmatprep.subr.mxu0 0.0
  %624 = vmatpush1.msra.mxu0 %v183
  %625 = vmatprep.subr.mxu0 0.0
  %626 = vmatpush1.msra.mxu0 %v184
  %627 = vmatprep.subr.mxu0 0.0
  %628 = vmatpush1.msra.mxu0 %v185
  %629 = vmatprep.subr.mxu0 0.0
  %630 = vmatpush1.msra.mxu0 %v186
  %631 = vmatprep.subr.mxu0 0.0
  %632 = vmatpush1.msra.mxu0 %v187
  %633 = vmatprep.subr.mxu0 0.0
  %634 = vmatpush1.msra.mxu0 %v188
  %635 = vmatprep.subr.mxu0 0.0
  %636 = vmatpush1.msra.mxu0 %v189
  %637 = vmatprep.mubr.f32.mxu0 %v23
  %638 = vmatmul.mubr.f32.gmra.mrb[0].mxu0 %v22
  %v639 = vpop.f32.mrb[0].mxu0
  %v640 = vadd.f32 %v570, %v639
  %v641 = vpop.f32.mrb[0].mxu0
  %642 = vdwg.mxu0
  %643 = vmatprep.subr.mxu0 0.0
  %644 = vmatpush1.msra.mxu0 %v190
  %645 = vmatprep.subr.mxu0 0.0
  %646 = vmatpush1.msra.mxu0 %v191
  %647 = vmatprep.subr.mxu0 0.0
  %648 = vmatpush1.msra.mxu0 %v192
  %649 = vmatprep.subr.mxu0 0.0
  %650 = vmatpush1.msra.mxu0 %v193
  %651 = vmatprep.subr.mxu0 0.0
  %652 = vmatpush1.msra.mxu0 %v194
  %653 = vmatprep.subr.mxu0 0.0
  %654 = vmatpush1.msra.mxu0 %v195
  %655 = vmatprep.subr.mxu0 0.0
  %656 = vmatpush1.msra.mxu0 %v196
  %657 = vmatprep.subr.mxu0 0.0
  %658 = vmatpush1.msra.mxu0 %v197
  %659 = vmatprep.subr.mxu0 0.0
  %660 = vmatpush1.msra.mxu0 %v198
  %661 = vmatprep.subr.mxu0 0.0
  %662 = vmatpush1.msra.mxu0 %v199
  %663 = vmatprep.subr.mxu0 0.0
  %664 = vmatpush1.msra.mxu0 %v200
  %665 = vmatprep.subr.mxu0 0.0
  %666 = vmatpush1.msra.mxu0 %v201
  %667 = vmatprep.subr.mxu0 0.0
  %668 = vmatpush1.msra.mxu0 %v202
  %669 = vmatprep.subr.mxu0 0.0
  %670 = vmatpush1.msra.mxu0 %v203
  %671 = vmatprep.subr.mxu0 0.0
  %672 = vmatpush1.msra.mxu0 %v204
  %673 = vmatprep.subr.mxu0 0.0
  %674 = vmatpush1.msra.mxu0 %v205
  %675 = vmatprep.subr.mxu0 0.0
  %676 = vmatpush1.msra.mxu0 %v206
  %677 = vmatprep.subr.mxu0 0.0
  %678 = vmatpush1.msra.mxu0 %v207
  %679 = vmatprep.subr.mxu0 0.0
  %680 = vmatpush1.msra.mxu0 %v208
  %681 = vmatprep.subr.mxu0 0.0
  %682 = vmatpush1.msra.mxu0 %v209
  %683 = vmatprep.subr.mxu0 0.0
  %684 = vmatpush1.msra.mxu0 %v210
  %685 = vmatprep.subr.mxu0 0.0
  %686 = vmatpush1.msra.mxu0 %v211
  %687 = vmatprep.subr.mxu0 0.0
  %688 = vmatpush1.msra.mxu0 %v212
  %689 = vmatprep.subr.mxu0 0.0
  %690 = vmatpush1.msra.mxu0 %v213
  %691 = vmatprep.subr.mxu0 0.0
  %692 = vmatpush1.msra.mxu0 %v214
  %693 = vmatprep.subr.mxu0 0.0
  %694 = vmatpush1.msra.mxu0 %v215
  %695 = vmatprep.subr.mxu0 0.0
  %696 = vmatpush1.msra.mxu0 %v216
  %697 = vmatprep.subr.mxu0 0.0
  %698 = vmatpush1.msra.mxu0 %v217
  %699 = vmatprep.subr.mxu0 0.0
  %700 = vmatpush1.msra.mxu0 %v218
  %701 = vmatprep.subr.mxu0 0.0
  %702 = vmatpush1.msra.mxu0 %v219
  %703 = vmatprep.subr.mxu0 0.0
  %704 = vmatpush1.msra.mxu0 %v220
  %705 = vmatprep.subr.mxu0 0.0
  %706 = vmatpush1.msra.mxu0 %v221
  %707 = vmatprep.mubr.f32.mxu0 %v25
  %708 = vmatmul.mubr.f32.gmra.mrb[0].mxu0 %v24
  %v709 = vpop.f32.mrb[0].mxu0
  %v710 = vadd.f32 %v640, %v709
  %v711 = vpop.f32.mrb[0].mxu0
  %712 = vdwg.mxu0
  %713 = vmatprep.subr.mxu0 0.0
  %714 = vmatpush1.msra.mxu0 %v222
  %715 = vmatprep.subr.mxu0 0.0
  %716 = vmatpush1.msra.mxu0 %v223
  %717 = vmatprep.subr.mxu0 0.0
  %718 = vmatpush1.msra.mxu0 %v224
  %719 = vmatprep.subr.mxu0 0.0
  %720 = vmatpush1.msra.mxu0 %v225
  %721 = vmatprep.subr.mxu0 0.0
  %722 = vmatpush1.msra.mxu0 %v226
  %723 = vmatprep.subr.mxu0 0.0
  %724 = vmatpush1.msra.mxu0 %v227
  %725 = vmatprep.subr.mxu0 0.0
  %726 = vmatpush1.msra.mxu0 %v228
  %727 = vmatprep.subr.mxu0 0.0
  %728 = vmatpush1.msra.mxu0 %v229
  %729 = vmatprep.subr.mxu0 0.0
  %730 = vmatpush1.msra.mxu0 %v230
  %731 = vmatprep.subr.mxu0 0.0
  %732 = vmatpush1.msra.mxu0 %v231
  %733 = vmatprep.subr.mxu0 0.0
  %734 = vmatpush1.msra.mxu0 %v232
  %735 = vmatprep.subr.mxu0 0.0
  %736 = vmatpush1.msra.mxu0 %v233
  %737 = vmatprep.subr.mxu0 0.0
  %738 = vmatpush1.msra.mxu0 %v234
  %739 = vmatprep.subr.mxu0 0.0
  %740 = vmatpush1.msra.mxu0 %v235
  %741 = vmatprep.subr.mxu0 0.0
  %742 = vmatpush1.msra.mxu0 %v236
  %743 = vmatprep.subr.mxu0 0.0
  %744 = vmatpush1.msra.mxu0 %v237
  %745 = vmatprep.subr.mxu0 0.0
  %746 = vmatpush1.msra.mxu0 %v238
  %747 = vmatprep.subr.mxu0 0.0
  %748 = vmatpush1.msra.mxu0 %v239
  %749 = vmatprep.subr.mxu0 0.0
  %750 = vmatpush1.msra.mxu0 %v240
  %751 = vmatprep.subr.mxu0 0.0
  %752 = vmatpush1.msra.mxu0 %v241
  %753 = vmatprep.subr.mxu0 0.0
  %754 = vmatpush1.msra.mxu0 %v242
  %755 = vmatprep.subr.mxu0 0.0
  %756 = vmatpush1.msra.mxu0 %v243
  %757 = vmatprep.subr.mxu0 0.0
  %758 = vmatpush1.msra.mxu0 %v244
  %759 = vmatprep.subr.mxu0 0.0
  %760 = vmatpush1.msra.mxu0 %v245
  %761 = vmatprep.subr.mxu0 0.0
  %762 = vmatpush1.msra.mxu0 %v246
  %763 = vmatprep.subr.mxu0 0.0
  %764 = vmatpush1.msra.mxu0 %v247
  %765 = vmatprep.subr.mxu0 0.0
  %766 = vmatpush1.msra.mxu0 %v248
  %767 = vmatprep.subr.mxu0 0.0
  %768 = vmatpush1.msra.mxu0 %v249
  %769 = vmatprep.subr.mxu0 0.0
  %770 = vmatpush1.msra.mxu0 %v250
  %771 = vmatprep.subr.mxu0 0.0
  %772 = vmatpush1.msra.mxu0 %v251
  %773 = vmatprep.subr.mxu0 0.0
  %774 = vmatpush1.msra.mxu0 %v252
  %775 = vmatprep.subr.mxu0 0.0
  %776 = vmatpush1.msra.mxu0 %v253
  %777 = vmatprep.mubr.f32.mxu0 %v27
  %778 = vmatmul.mubr.f32.gmra.mrb[0].mxu0 %v26
  %v779 = vpop.f32.mrb[0].mxu0
  %v780 = vadd.f32 %v710, %v779
  %v781 = vpop.f32.mrb[0].mxu0
  %782 = vdwg.mxu0
  %783 = vmatprep.subr.mxu0 0.0
  %784 = vmatpush1.msra.mxu0 %v254
  %785 = vmatprep.subr.mxu0 0.0
  %786 = vmatpush1.msra.mxu0 %v255
  %787 = vmatprep.subr.mxu0 0.0
  %788 = vmatpush1.msra.mxu0 %v256
  %789 = vmatprep.subr.mxu0 0.0
  %790 = vmatpush1.msra.mxu0 %v257
  %791 = vmatprep.subr.mxu0 0.0
  %792 = vmatpush1.msra.mxu0 %v258
  %793 = vmatprep.subr.mxu0 0.0
  %794 = vmatpush1.msra.mxu0 %v259
  %795 = vmatprep.subr.mxu0 0.0
  %796 = vmatpush1.msra.mxu0 %v260
  %797 = vmatprep.subr.mxu0 0.0
  %798 = vmatpush1.msra.mxu0 %v261
  %799 = vmatprep.subr.mxu0 0.0
  %800 = vmatpush1.msra.mxu0 %v262
  %801 = vmatprep.subr.mxu0 0.0
  %802 = vmatpush1.msra.mxu0 %v263
  %803 = vmatprep.subr.mxu0 0.0
  %804 = vmatpush1.msra.mxu0 %v264
  %805 = vmatprep.subr.mxu0 0.0
  %806 = vmatpush1.msra.mxu0 %v265
  %807 = vmatprep.subr.mxu0 0.0
  %808 = vmatpush1.msra.mxu0 %v266
  %809 = vmatprep.subr.mxu0 0.0
  %810 = vmatpush1.msra.mxu0 %v267
  %811 = vmatprep.subr.mxu0 0.0
  %812 = vmatpush1.msra.mxu0 %v268
  %813 = vmatprep.subr.mxu0 0.0
  %814 = vmatpush1.msra.mxu0 %v269
  %815 = vmatprep.subr.mxu0 0.0
  %816 = vmatpush1.msra.mxu0 %v270
  %817 = vmatprep.subr.mxu0 0.0
  %818 = vmatpush1.msra.mxu0 %v271
  %819 = vmatprep.subr.mxu0 0.0
  %820 = vmatpush1.msra.mxu0 %v272
  %821 = vmatprep.subr.mxu0 0.0
  %822 = vmatpush1.msra.mxu0 %v273
  %823 = vmatprep.subr.mxu0 0.0
  %824 = vmatpush1.msra.mxu0 %v274
  %825 = vmatprep.subr.mxu0 0.0
  %826 = vmatpush1.msra.mxu0 %v275
  %827 = vmatprep.subr.mxu0 0.0
  %828 = vmatpush1.msra.mxu0 %v276
  %829 = vmatprep.subr.mxu0 0.0
  %830 = vmatpush1.msra.mxu0 %v277
  %831 = vmatprep.subr.mxu0 0.0
  %832 = vmatpush1.msra.mxu0 %v278
  %833 = vmatprep.subr.mxu0 0.0
  %834 = vmatpush1.msra.mxu0 %v279
  %835 = vmatprep.subr.mxu0 0.0
  %836 = vmatpush1.msra.mxu0 %v280
  %837 = vmatprep.subr.mxu0 0.0
  %838 = vmatpush1.msra.mxu0 %v281
  %839 = vmatprep.subr.mxu0 0.0
  %840 = vmatpush1.msra.mxu0 %v282
  %841 = vmatprep.subr.mxu0 0.0
  %842 = vmatpush1.msra.mxu0 %v283
  %843 = vmatprep.subr.mxu0 0.0
  %844 = vmatpush1.msra.mxu0 %v284
  %845 = vmatprep.subr.mxu0 0.0
  %846 = vmatpush1.msra.mxu0 %v285
  %847 = vmatprep.mubr.f32.mxu0 %v29
  %848 = vmatmul.mubr.f32.gmra.mrb[0].mxu0 %v28
  %v849 = vpop.f32.mrb[0].mxu0
  %v850 = vadd.f32 %v780, %v849
  %v851 = vpop.f32.mrb[0].mxu0
  %852 = vdwg.mxu0
  %853 = vst [vmem:[%s3] sm:$0xff] %v850
  // Predicated region
  $region14: #{_pulse_core.7} parent=0 // pred_check
    _
  $region15: #{_pulse_core.7} parent=0 // pred_check_branch
    %855 = sbr.rel (0) target = $region17
  $region16: #{_pulse_core.7} parent=0 // pred_region
    _
  $region17: #{_pulse_core.7} parent=0 // pred_fallthru
    _
  // Predicated region
  $region18: #{_pulse_core.7} parent=0 // pred_check
    _
  $region19: #{_pulse_core.7} parent=0 // pred_check_branch
    %857 = sbr.rel (0) target = $region21
  $region20: #{_pulse_core.7} parent=0 // pred_region
    _
  $region21: #{_pulse_core.7} parent=0 // pred_fallthru
    _

</llo_original>
